<compile_context>
chip_gen: v6e
topology: v6e:2x2x1
jax: 0.10.0
libtpu: 0.0.40
codegen_flags: <defaults>
</compile_context>

<pallas_src>
import jax
import jax.numpy as jnp
from jax.experimental import pallas as pl
from jax.experimental.pallas import tpu as pltpu

# Problem sizes (small, consistent with the module's forward).
N, H, W = 2, 16, 16          # img: (N, H, W); unsqueeze(dim=1) adds the C=1 axis
K = 5                        # conv kernel height (kernel_size = (5, 1))
C1, C2 = 6, 12               # conv channel counts
HIDDEN = 32                  # rnn_layer.hidden_size (unidirectional)
NUM_CLASSES = 3
LANE = 128                   # TPU lane width
BATCH_TILE = 128             # max batch rows per grid step (bt*12 = 1536 MXU rows)


def _sigmoid(x):
    # sigmoid(x) == 0.5 * tanh(x / 2) + 0.5 : one EUP push + cheap VPU mul/add.
    return 0.5 * jnp.tanh(0.5 * x) + 0.5


def crnn_kernel(x_ref, w1_ref, b1_ref, w2_ref, b2_ref,
                wih_ref, brnn_ref, whh_ref, wd_ref, bd_ref, out_ref):
    f32 = jnp.float32
    x = x_ref[...]                                     # (BT, H, W) f32
    bt, h, w = x.shape
    h1 = h - K + 1                                     # conv1 output height (12)
    h1p = h1 // 2                                      # after first 2x2 pool (6)
    wp = w // 2                                        # pooled width (8)
    h2 = h1p - K + 1                                   # conv2 output height (2)
    t_steps = wp // 2                                  # RNN sequence length (4)
    half1 = wp * C1                                    # 48
    half2 = t_steps * C2                               # 48

    # ---- conv1 + sigmoid + 2x2 maxpool ------------------------------------
    # im2col over the K height taps only (lane concat of shifted slices), then
    # ONE MXU matmul against a block-diagonal (K*W, 256) weight.  Output lanes:
    # even-W positions in [0,128), odd-W positions in [128,256) -> the W-pool
    # is a max of two vreg-aligned 48-lane slices (pure VPU, no XLU rotate).
    a1 = jnp.concatenate([x[:, k:k + h1, :] for k in range(K)], axis=-1)
    a1 = a1.reshape(bt * h1, K * w)                    # (BT*12, 80)
    z1 = jnp.dot(a1, w1_ref[...], preferred_element_type=f32) + b1_ref[...]
    s1 = _sigmoid(z1)                                  # (BT*12, 256)
    pw1 = jnp.maximum(s1[:, :half1], s1[:, LANE:LANE + half1])   # (BT*12, 48)
    ph1 = pw1.reshape(bt, h1p, 2, half1)
    p1 = jnp.maximum(ph1[:, :, 0, :], ph1[:, :, 1, :])  # H-pool -> (BT, 6, 48)

    # ---- conv2 + sigmoid + 2x2 maxpool ------------------------------------
    # Same trick: fused K-tap im2col + one block-diagonal matmul with
    # vreg-aligned [even-W | odd-W] output halves.
    a2 = jnp.concatenate([p1[:, k:k + h2, :] for k in range(K)], axis=-1)
    a2 = a2.reshape(bt * h2, K * wp * C1)              # (BT*2, 240)
    z2 = jnp.dot(a2, w2_ref[...], preferred_element_type=f32) + b2_ref[...]
    s2 = _sigmoid(z2)                                  # (BT*2, 256)
    pw2 = jnp.maximum(s2[:, :half2], s2[:, LANE:LANE + half2])   # (BT*2, 48)
    ph2 = pw2.reshape(bt, h2, half2)
    feat = jnp.maximum(ph2[:, 0, :], ph2[:, 1, :])     # H-pool -> (BT, T*C2 = 48)
    # feat[b, t*C2 + c] == feature[t][b, c] of the PyTorch forward (H'' == 1).

    # ---- RNN: single-layer unidirectional tanh RNN, h0 = 0 -----------------
    # Input projection for ALL time steps hoisted into one matmul whose output
    # puts step t's HIDDEN values at lanes [t*128, t*128+HIDDEN) -> each slice
    # in the recurrence is vreg-aligned (no lane rotate on the serial chain).
    # (b_ih + b_hh) is pre-summed into brnn.
    xs = jnp.dot(feat, wih_ref[...], preferred_element_type=f32) + brnn_ref[...]
    whh = whh_ref[...]                                 # (HIDDEN, HIDDEN) == weight_hh_l0.T
    hstate = jnp.zeros((bt, HIDDEN), f32)
    for t in range(t_steps):                           # serial recurrence (unavoidable)
        hstate = jnp.tanh(xs[:, t * LANE:t * LANE + HIDDEN]
                          + jnp.dot(hstate, whh, preferred_element_type=f32))

    # ---- dense: Linear(HIDDEN, NUM_CLASSES) on Y[-1] == h_T, padded to 128 lanes
    out_ref[...] = (jnp.dot(hstate, wd_ref[...], preferred_element_type=f32)
                    + bd_ref[...])


# --------------------------- weight packing (run once) ----------------------

def _evenodd_cols(n_groups, group_size):
    """Column permutation putting even-index groups first, then odd-index groups."""
    c = jnp.arange(group_size)
    even = (jnp.arange(0, n_groups, 2)[:, None] * group_size + c[None, :]).reshape(-1)
    odd = (jnp.arange(1, n_groups, 2)[:, None] * group_size + c[None, :]).reshape(-1)
    return jnp.concatenate([even, odd])


def _pad_evenodd(mat_perm, half):
    """Place the [even | odd] halves into two separate 128-lane groups (zero pad)."""
    rows = mat_perm.shape[0]
    out = jnp.zeros((rows, 2 * LANE), jnp.float32)
    out = out.at[:, :half].set(mat_perm[:, :half])
    out = out.at[:, LANE:LANE + half].set(mat_perm[:, half:])
    return out


def pack_params(params, h, w):
    """Fold conv / RNN / dense weights into lane-dense, vreg-aligned operands.

    Call ONCE (outside the jitted forward); the packed tuple is what the
    pallas_call consumes — no per-call XLA packing in front of the kernel.
    """
    f32 = jnp.float32
    wp = w // 2
    t = wp // 2
    half1 = wp * C1
    half2 = t * C2

    # conv1: block-diagonal over W; output cols [even-W | odd-W] in separate vregs.
    w1_nat = jnp.einsum("kc,wv->kwvc", params["w1"],
                        jnp.eye(w, dtype=f32)).reshape(K * w, w * C1)
    perm1 = _evenodd_cols(w, C1)
    w1_blk = _pad_evenodd(w1_nat[:, perm1], half1)                 # (K*W, 256)
    b1_row = _pad_evenodd(jnp.tile(params["b1"], (1, w))[:, perm1], half1)

    # conv2: block-diagonal over pooled W, same output-column layout.
    w2_nat = jnp.einsum("kio,wv->kwivo", params["w2"],
                        jnp.eye(wp, dtype=f32)).reshape(K * wp * C1, wp * C2)
    perm2 = _evenodd_cols(wp, C2)
    w2_blk = _pad_evenodd(w2_nat[:, perm2], half2)                 # (K*WP*C1, 256)
    b2_row = _pad_evenodd(jnp.tile(params["b2"], (1, wp))[:, perm2], half2)

    # RNN input projection for all T steps: step t's outputs at lanes [t*128, t*128+H).
    wih_blk = jnp.zeros((t * C2, t * LANE), f32)
    brnn_row = jnp.zeros((1, t * LANE), f32)
    bsum = params["bih"] + params["bhh"]
    for step in range(t):
        wih_blk = wih_blk.at[step * C2:(step + 1) * C2,
                             step * LANE:step * LANE + HIDDEN].set(params["wih_t"])
        brnn_row = brnn_row.at[:, step * LANE:step * LANE + HIDDEN].set(bsum)

    # dense padded to 128 output lanes (lane-dense unmasked stores).
    wd_pad = jnp.zeros((HIDDEN, LANE), f32).at[:, :NUM_CLASSES].set(params["wd_t"])
    bd_pad = jnp.zeros((1, LANE), f32).at[:, :NUM_CLASSES].set(params["bd"])

    return (w1_blk, b1_row, w2_blk, b2_row, wih_blk, brnn_row,
            params["whh_t"], wd_pad, bd_pad)


# --------------------------------- wrapper ----------------------------------

def _round_up(a, m):
    return -(-a // m) * m


def _cost_estimate(n_pad, h, w, packed):
    h1 = h - K + 1
    h1p = h1 // 2
    wp = w // 2
    h2 = h1p - K + 1
    t = wp // 2
    flops = n_pad * (2 * h1 * (K * w) * (2 * LANE)
                     + 2 * h2 * (K * wp * C1) * (2 * LANE)
                     + 2 * (t * C2) * (t * LANE)
                     + t * 2 * HIDDEN * HIDDEN
                     + 2 * HIDDEN * LANE)
    trans = n_pad * (h1 * 2 * LANE + h2 * 2 * LANE + t * HIDDEN)
    weight_bytes = sum(int(a.size) * 4 for a in packed)
    bytes_accessed = n_pad * (h * w * 4 + LANE * 4) + weight_bytes
    return pl.CostEstimate(flops=flops, transcendentals=trans,
                           bytes_accessed=bytes_accessed)


@jax.jit
def crnn_forward(img, packed):
    n, h, w = img.shape
    assert (h - K + 1) % 2 == 0 and w % 4 == 0
    # With H=16, the post-conv flattened height is exactly 1, so feature dim == C2.
    assert ((h - K + 1) // 2 - K + 1) == 2, "kernel assumes conv-output H'' == 1 (true for H=16)"

    # Batch tile: as large as the batch allows (up to BATCH_TILE), multiple of 8.
    # Remainder handling: pad the batch to a multiple of the tile, slice after.
    bt = min(BATCH_TILE, _round_up(n, 8))
    n_pad = _round_up(n, bt)
    x = img.astype(jnp.float32)
    if n_pad != n:
        x = jnp.pad(x, ((0, n_pad - n), (0, 0), (0, 0)))

    # TODO(synk): for very large batches on v7x, fold 8 batch elements into the
    # lane dim of the input block to avoid the 16/128-lane input inflation.
    in_specs = [pl.BlockSpec((bt, h, w), lambda i: (i, 0, 0))]
    in_specs += [pl.BlockSpec(a.shape, lambda i: (0, 0)) for a in packed]

    out = pl.pallas_call(
        crnn_kernel,
        out_shape=jax.ShapeDtypeStruct((n_pad, LANE), jnp.float32),
        grid=(n_pad // bt,),
        in_specs=in_specs,
        out_specs=pl.BlockSpec((bt, LANE), lambda i: (i, 0)),
        compiler_params=pltpu.CompilerParams(
            dimension_semantics=("parallel",),
            vmem_limit_bytes=48 * 1024 * 1024),
        cost_estimate=_cost_estimate(n_pad, h, w, packed),
    )(x, *packed)
    return out[:n, :NUM_CLASSES]


# ----------------------------- params & reference ---------------------------

def init_params(key):
    """Deterministic, PyTorch-style uniform(-1/sqrt(fan_in), +1/sqrt(fan_in)) init."""
    ks = jax.random.split(key, 10)

    def u(k, shape, fan_in):
        bound = 1.0 / float(fan_in) ** 0.5
        return jax.random.uniform(k, shape, jnp.float32, -bound, bound)

    return dict(
        w1=u(ks[0], (K, C1), 1 * K),               # conv1.weight[c,0,k,0] == w1[k,c]
        b1=u(ks[1], (1, C1), 1 * K),
        w2=u(ks[2], (K, C1, C2), C1 * K),          # conv2.weight[co,ci,k,0] == w2[k,ci,co]
        b2=u(ks[3], (1, C2), C1 * K),
        wih_t=u(ks[4], (C2, HIDDEN), HIDDEN),      # rnn.weight_ih_l0.T
        bih=u(ks[5], (1, HIDDEN), HIDDEN),
        whh_t=u(ks[6], (HIDDEN, HIDDEN), HIDDEN),  # rnn.weight_hh_l0.T
        bhh=u(ks[7], (1, HIDDEN), HIDDEN),
        wd_t=u(ks[8], (HIDDEN, NUM_CLASSES), HIDDEN),  # dense.weight.T
        bd=u(ks[9], (1, NUM_CLASSES), HIDDEN),
    )


def crnn_reference(img, params):
    """Pure-JAX NCHW reference mirroring the PyTorch forward exactly."""
    x = img[:, None, :, :]
    w1 = jnp.transpose(params["w1"], (1, 0))[:, None, :, None]       # (C1,1,K,1)
    y = jax.lax.conv_general_dilated(x, w1, (1, 1), "VALID",
                                     dimension_numbers=("NCHW", "OIHW", "NCHW"),
                                     precision=jax.lax.Precision.HIGHEST)
    y = jax.nn.sigmoid(y + params["b1"].reshape(1, C1, 1, 1))
    y = jax.lax.reduce_window(y, -jnp.inf, jax.lax.max, (1, 1, 2, 2), (1, 1, 2, 2), "VALID")
    w2 = jnp.transpose(params["w2"], (2, 1, 0))[:, :, :, None]       # (C2,C1,K,1)
    y = jax.lax.conv_general_dilated(y, w2, (1, 1), "VALID",
                                     dimension_numbers=("NCHW", "OIHW", "NCHW"),
                                     precision=jax.lax.Precision.HIGHEST)
    y = jax.nn.sigmoid(y + params["b2"].reshape(1, C2, 1, 1))
    y = jax.lax.reduce_window(y, -jnp.inf, jax.lax.max, (1, 1, 2, 2), (1, 1, 2, 2), "VALID")
    n, c, hh, ww = y.shape
    feat = jnp.transpose(y.reshape(n, c * hh, ww), (2, 0, 1))        # (T, N, F)
    hi = jax.lax.Precision.HIGHEST
    hstate = jnp.zeros((n, HIDDEN), jnp.float32)
    for t in range(feat.shape[0]):
        hstate = jnp.tanh(jnp.dot(feat[t], params["wih_t"], precision=hi) + params["bih"]
                          + jnp.dot(hstate, params["whh_t"], precision=hi) + params["bhh"])
    return jnp.dot(hstate, params["wd_t"], precision=hi) + params["bd"]


if __name__ == "__main__":
    key = jax.random.PRNGKey(0)
    pkey, xkey = jax.random.split(key)
    params = init_params(pkey)

    # Pack weights ONCE, outside the jitted forward (perf review item).
    packed = pack_params(params, H, W)
    jax.block_until_ready(packed)

    # Small case (module-consistent shapes): batch=2, H=W=16.
    img = jax.random.normal(xkey, (N, H, W), jnp.float32)
    out = crnn_forward(img, packed)
    jax.block_until_ready(out)
    assert out.shape == (N, NUM_CLASSES) and out.dtype == jnp.float32
    # NOTE: kernel matmuls use default MXU precision (reference uses HIGHEST);
    # 5e-3 tolerance documents the expected reduced-precision-pass difference.
    ref = crnn_reference(img, params)
    max_err = float(jnp.max(jnp.abs(out - ref)))
    assert max_err < 5e-3, f"kernel/reference mismatch (n=2), max abs err = {max_err}"

    # Non-multiple batch exercises the padding / remainder path.
    img2 = jax.random.normal(jax.random.PRNGKey(7), (37, H, W), jnp.float32)
    out2 = crnn_forward(img2, packed)
    jax.block_until_ready(out2)
    ref2 = crnn_reference(img2, params)
    max_err2 = float(jnp.max(jnp.abs(out2 - ref2)))
    assert out2.shape == (37, NUM_CLASSES)
    assert max_err2 < 5e-3, f"kernel/reference mismatch (n=37), max abs err = {max_err2}"

    # TODO(synk): the module's Python-side `self.state` caching (returned RNN
    # state) is not represented; the kernel returns only the class logits.
    print("KERNEL_OK")
</pallas_src>

<mosaic_0001>
module attributes {stable_mosaic.version = 11 : i64} {
  func.func @crnn_kernel(%arg0: i32, %arg1: memref<8x16x16xf32, #tpu.memory_space<vmem>>, %arg2: memref<80x256xf32, #tpu.memory_space<vmem>>, %arg3: memref<1x256xf32, #tpu.memory_space<vmem>>, %arg4: memref<240x256xf32, #tpu.memory_space<vmem>>, %arg5: memref<1x256xf32, #tpu.memory_space<vmem>>, %arg6: memref<48x512xf32, #tpu.memory_space<vmem>>, %arg7: memref<1x512xf32, #tpu.memory_space<vmem>>, %arg8: memref<32x32xf32, #tpu.memory_space<vmem>>, %arg9: memref<32x128xf32, #tpu.memory_space<vmem>>, %arg10: memref<1x128xf32, #tpu.memory_space<vmem>>, %arg11: memref<8x128xf32, #tpu.memory_space<vmem>>) attributes {dimension_semantics = [#tpu.dimension_semantics<parallel>], iteration_bounds = array<i64: 1>, scalar_prefetch = 0 : i64, scratch_operands = 0 : i64, tpu.core_type = #tpu.core_type<tc>, window_params = [{transform_indices = @transform_0, window_bounds = array<i64: 8, 16, 16>}, {pipeline_mode = #tpu.pipeline_mode<synchronous>, transform_indices = @transform_1, window_bounds = array<i64: 80, 256>}, {pipeline_mode = #tpu.pipeline_mode<synchronous>, transform_indices = @transform_2, window_bounds = array<i64: 1, 256>}, {pipeline_mode = #tpu.pipeline_mode<synchronous>, transform_indices = @transform_3, window_bounds = array<i64: 240, 256>}, {pipeline_mode = #tpu.pipeline_mode<synchronous>, transform_indices = @transform_4, window_bounds = array<i64: 1, 256>}, {pipeline_mode = #tpu.pipeline_mode<synchronous>, transform_indices = @transform_5, window_bounds = array<i64: 48, 512>}, {pipeline_mode = #tpu.pipeline_mode<synchronous>, transform_indices = @transform_6, window_bounds = array<i64: 1, 512>}, {pipeline_mode = #tpu.pipeline_mode<synchronous>, transform_indices = @transform_7, window_bounds = array<i64: 32, 32>}, {pipeline_mode = #tpu.pipeline_mode<synchronous>, transform_indices = @transform_8, window_bounds = array<i64: 32, 128>}, {pipeline_mode = #tpu.pipeline_mode<synchronous>, transform_indices = @transform_9, window_bounds = array<i64: 1, 128>}, {transform_indices = @transform_10, window_bounds = array<i64: 8, 128>}]} {
    %c0 = arith.constant 0 : index
    %c0_0 = arith.constant 0 : index
    %c0_1 = arith.constant 0 : index
    %0 = vector.load %arg1[%c0, %c0_0, %c0_1] : memref<8x16x16xf32, #tpu.memory_space<vmem>>, vector<8x16x16xf32>
    %1 = vector.extract_strided_slice %0 {offsets = [0, 0, 0], sizes = [8, 12, 16], strides = [1, 1, 1]} : vector<8x16x16xf32> to vector<8x12x16xf32>
    %2 = vector.extract_strided_slice %0 {offsets = [0, 1, 0], sizes = [8, 12, 16], strides = [1, 1, 1]} : vector<8x16x16xf32> to vector<8x12x16xf32>
    %3 = vector.extract_strided_slice %0 {offsets = [0, 2, 0], sizes = [8, 12, 16], strides = [1, 1, 1]} : vector<8x16x16xf32> to vector<8x12x16xf32>
    %4 = vector.extract_strided_slice %0 {offsets = [0, 3, 0], sizes = [8, 12, 16], strides = [1, 1, 1]} : vector<8x16x16xf32> to vector<8x12x16xf32>
    %5 = vector.extract_strided_slice %0 {offsets = [0, 4, 0], sizes = [8, 12, 16], strides = [1, 1, 1]} : vector<8x16x16xf32> to vector<8x12x16xf32>
    %6 = tpu.concatenate %1, %2, %3, %4, %5 in 2 : vector<8x12x16xf32>, vector<8x12x16xf32>, vector<8x12x16xf32>, vector<8x12x16xf32>, vector<8x12x16xf32> -> vector<8x12x80xf32>
    %7 = vector.shape_cast %6 : vector<8x12x80xf32> to vector<96x80xf32>
    %c0_2 = arith.constant 0 : index
    %c0_3 = arith.constant 0 : index
    %8 = vector.load %arg2[%c0_2, %c0_3] : memref<80x256xf32, #tpu.memory_space<vmem>>, vector<80x256xf32>
    %cst = arith.constant dense<0.000000e+00> : vector<96x256xf32>
    %9 = tpu.matmul %7, %8, %cst {dimension_numbers = #tpu.dot_dimension_numbers<[1], [0], [0], [1], [0, 0, 1, 1], [], []>} : vector<96x80xf32>, vector<80x256xf32>, vector<96x256xf32> -> vector<96x256xf32>
    %c0_4 = arith.constant 0 : index
    %c0_5 = arith.constant 0 : index
    %10 = vector.load %arg3[%c0_4, %c0_5] : memref<1x256xf32, #tpu.memory_space<vmem>>, vector<1x256xf32>
    %11 = vector.broadcast %10 : vector<1x256xf32> to vector<96x256xf32>
    %12 = arith.addf %9, %11 : vector<96x256xf32>
    %cst_6 = arith.constant 5.000000e-01 : f32
    %13 = vector.broadcast %cst_6 : f32 to vector<96x256xf32>
    %14 = arith.mulf %13, %12 : vector<96x256xf32>
    %15 = math.tanh %14 : vector<96x256xf32>
    %cst_7 = arith.constant 5.000000e-01 : f32
    %16 = vector.broadcast %cst_7 : f32 to vector<96x256xf32>
    %17 = arith.mulf %16, %15 : vector<96x256xf32>
    %cst_8 = arith.constant 5.000000e-01 : f32
    %18 = vector.broadcast %cst_8 : f32 to vector<96x256xf32>
    %19 = arith.addf %17, %18 : vector<96x256xf32>
    %20 = vector.extract_strided_slice %19 {offsets = [0, 0], sizes = [96, 48], strides = [1, 1]} : vector<96x256xf32> to vector<96x48xf32>
    %21 = vector.extract_strided_slice %19 {offsets = [0, 128], sizes = [96, 48], strides = [1, 1]} : vector<96x256xf32> to vector<96x48xf32>
    %22 = arith.maximumf %20, %21 : vector<96x48xf32>
    %23 = vector.shape_cast %22 : vector<96x48xf32> to vector<8x6x2x48xf32>
    %24 = vector.extract_strided_slice %23 {offsets = [0, 0, 0, 0], sizes = [8, 6, 1, 48], strides = [1, 1, 1, 1]} : vector<8x6x2x48xf32> to vector<8x6x1x48xf32>
    %25 = vector.shape_cast %24 : vector<8x6x1x48xf32> to vector<8x6x48xf32>
    %26 = vector.extract_strided_slice %23 {offsets = [0, 0, 1, 0], sizes = [8, 6, 1, 48], strides = [1, 1, 1, 1]} : vector<8x6x2x48xf32> to vector<8x6x1x48xf32>
    %27 = vector.shape_cast %26 : vector<8x6x1x48xf32> to vector<8x6x48xf32>
    %28 = arith.maximumf %25, %27 : vector<8x6x48xf32>
    %29 = vector.extract_strided_slice %28 {offsets = [0, 0, 0], sizes = [8, 2, 48], strides = [1, 1, 1]} : vector<8x6x48xf32> to vector<8x2x48xf32>
    %30 = vector.extract_strided_slice %28 {offsets = [0, 1, 0], sizes = [8, 2, 48], strides = [1, 1, 1]} : vector<8x6x48xf32> to vector<8x2x48xf32>
    %31 = vector.extract_strided_slice %28 {offsets = [0, 2, 0], sizes = [8, 2, 48], strides = [1, 1, 1]} : vector<8x6x48xf32> to vector<8x2x48xf32>
    %32 = vector.extract_strided_slice %28 {offsets = [0, 3, 0], sizes = [8, 2, 48], strides = [1, 1, 1]} : vector<8x6x48xf32> to vector<8x2x48xf32>
    %33 = vector.extract_strided_slice %28 {offsets = [0, 4, 0], sizes = [8, 2, 48], strides = [1, 1, 1]} : vector<8x6x48xf32> to vector<8x2x48xf32>
    %34 = tpu.concatenate %29, %30, %31, %32, %33 in 2 : vector<8x2x48xf32>, vector<8x2x48xf32>, vector<8x2x48xf32>, vector<8x2x48xf32>, vector<8x2x48xf32> -> vector<8x2x240xf32>
    %35 = vector.shape_cast %34 : vector<8x2x240xf32> to vector<16x240xf32>
    %c0_9 = arith.constant 0 : index
    %c0_10 = arith.constant 0 : index
    %36 = vector.load %arg4[%c0_9, %c0_10] : memref<240x256xf32, #tpu.memory_space<vmem>>, vector<240x256xf32>
    %cst_11 = arith.constant dense<0.000000e+00> : vector<16x256xf32>
    %37 = tpu.matmul %35, %36, %cst_11 {dimension_numbers = #tpu.dot_dimension_numbers<[1], [0], [0], [1], [0, 0, 1, 1], [], []>} : vector<16x240xf32>, vector<240x256xf32>, vector<16x256xf32> -> vector<16x256xf32>
    %c0_12 = arith.constant 0 : index
    %c0_13 = arith.constant 0 : index
    %38 = vector.load %arg5[%c0_12, %c0_13] : memref<1x256xf32, #tpu.memory_space<vmem>>, vector<1x256xf32>
    %39 = vector.broadcast %38 : vector<1x256xf32> to vector<16x256xf32>
    %40 = arith.addf %37, %39 : vector<16x256xf32>
    %cst_14 = arith.constant 5.000000e-01 : f32
    %41 = vector.broadcast %cst_14 : f32 to vector<16x256xf32>
    %42 = arith.mulf %41, %40 : vector<16x256xf32>
    %43 = math.tanh %42 : vector<16x256xf32>
    %cst_15 = arith.constant 5.000000e-01 : f32
    %44 = vector.broadcast %cst_15 : f32 to vector<16x256xf32>
    %45 = arith.mulf %44, %43 : vector<16x256xf32>
    %cst_16 = arith.constant 5.000000e-01 : f32
    %46 = vector.broadcast %cst_16 : f32 to vector<16x256xf32>
    %47 = arith.addf %45, %46 : vector<16x256xf32>
    %48 = vector.extract_strided_slice %47 {offsets = [0, 0], sizes = [16, 48], strides = [1, 1]} : vector<16x256xf32> to vector<16x48xf32>
    %49 = vector.extract_strided_slice %47 {offsets = [0, 128], sizes = [16, 48], strides = [1, 1]} : vector<16x256xf32> to vector<16x48xf32>
    %50 = arith.maximumf %48, %49 : vector<16x48xf32>
    %51 = vector.shape_cast %50 : vector<16x48xf32> to vector<8x2x48xf32>
    %52 = vector.extract_strided_slice %51 {offsets = [0, 0, 0], sizes = [8, 1, 48], strides = [1, 1, 1]} : vector<8x2x48xf32> to vector<8x1x48xf32>
    %53 = vector.shape_cast %52 : vector<8x1x48xf32> to vector<8x48xf32>
    %54 = vector.extract_strided_slice %51 {offsets = [0, 1, 0], sizes = [8, 1, 48], strides = [1, 1, 1]} : vector<8x2x48xf32> to vector<8x1x48xf32>
    %55 = vector.shape_cast %54 : vector<8x1x48xf32> to vector<8x48xf32>
    %56 = arith.maximumf %53, %55 : vector<8x48xf32>
    %c0_17 = arith.constant 0 : index
    %c0_18 = arith.constant 0 : index
    %57 = vector.load %arg6[%c0_17, %c0_18] : memref<48x512xf32, #tpu.memory_space<vmem>>, vector<48x512xf32>
    %cst_19 = arith.constant dense<0.000000e+00> : vector<8x512xf32>
    %58 = tpu.matmul %56, %57, %cst_19 {dimension_numbers = #tpu.dot_dimension_numbers<[1], [0], [0], [1], [0, 0, 1, 1], [], []>} : vector<8x48xf32>, vector<48x512xf32>, vector<8x512xf32> -> vector<8x512xf32>
    %c0_20 = arith.constant 0 : index
    %c0_21 = arith.constant 0 : index
    %59 = vector.load %arg7[%c0_20, %c0_21] : memref<1x512xf32, #tpu.memory_space<vmem>>, vector<1x512xf32>
    %60 = vector.broadcast %59 : vector<1x512xf32> to vector<8x512xf32>
    %61 = arith.addf %58, %60 : vector<8x512xf32>
    %c0_22 = arith.constant 0 : index
    %c0_23 = arith.constant 0 : index
    %62 = vector.load %arg8[%c0_22, %c0_23] : memref<32x32xf32, #tpu.memory_space<vmem>>, vector<32x32xf32>
    %cst_24 = arith.constant 0.000000e+00 : f32
    %63 = vector.broadcast %cst_24 : f32 to vector<8x32xf32>
    %64 = vector.extract_strided_slice %61 {offsets = [0, 0], sizes = [8, 32], strides = [1, 1]} : vector<8x512xf32> to vector<8x32xf32>
    %cst_25 = arith.constant dense<0.000000e+00> : vector<8x32xf32>
    %65 = tpu.matmul %63, %62, %cst_25 {dimension_numbers = #tpu.dot_dimension_numbers<[1], [0], [0], [1], [0, 0, 1, 1], [], []>} : vector<8x32xf32>, vector<32x32xf32>, vector<8x32xf32> -> vector<8x32xf32>
    %66 = arith.addf %64, %65 : vector<8x32xf32>
    %67 = math.tanh %66 : vector<8x32xf32>
    %68 = vector.extract_strided_slice %61 {offsets = [0, 128], sizes = [8, 32], strides = [1, 1]} : vector<8x512xf32> to vector<8x32xf32>
    %cst_26 = arith.constant dense<0.000000e+00> : vector<8x32xf32>
    %69 = tpu.matmul %67, %62, %cst_26 {dimension_numbers = #tpu.dot_dimension_numbers<[1], [0], [0], [1], [0, 0, 1, 1], [], []>} : vector<8x32xf32>, vector<32x32xf32>, vector<8x32xf32> -> vector<8x32xf32>
    %70 = arith.addf %68, %69 : vector<8x32xf32>
    %71 = math.tanh %70 : vector<8x32xf32>
    %72 = vector.extract_strided_slice %61 {offsets = [0, 256], sizes = [8, 32], strides = [1, 1]} : vector<8x512xf32> to vector<8x32xf32>
    %cst_27 = arith.constant dense<0.000000e+00> : vector<8x32xf32>
    %73 = tpu.matmul %71, %62, %cst_27 {dimension_numbers = #tpu.dot_dimension_numbers<[1], [0], [0], [1], [0, 0, 1, 1], [], []>} : vector<8x32xf32>, vector<32x32xf32>, vector<8x32xf32> -> vector<8x32xf32>
    %74 = arith.addf %72, %73 : vector<8x32xf32>
    %75 = math.tanh %74 : vector<8x32xf32>
    %76 = vector.extract_strided_slice %61 {offsets = [0, 384], sizes = [8, 32], strides = [1, 1]} : vector<8x512xf32> to vector<8x32xf32>
    %cst_28 = arith.constant dense<0.000000e+00> : vector<8x32xf32>
    %77 = tpu.matmul %75, %62, %cst_28 {dimension_numbers = #tpu.dot_dimension_numbers<[1], [0], [0], [1], [0, 0, 1, 1], [], []>} : vector<8x32xf32>, vector<32x32xf32>, vector<8x32xf32> -> vector<8x32xf32>
    %78 = arith.addf %76, %77 : vector<8x32xf32>
    %79 = math.tanh %78 : vector<8x32xf32>
    %c0_29 = arith.constant 0 : index
    %c0_30 = arith.constant 0 : index
    %80 = vector.load %arg9[%c0_29, %c0_30] : memref<32x128xf32, #tpu.memory_space<vmem>>, vector<32x128xf32>
    %cst_31 = arith.constant dense<0.000000e+00> : vector<8x128xf32>
    %81 = tpu.matmul %79, %80, %cst_31 {dimension_numbers = #tpu.dot_dimension_numbers<[1], [0], [0], [1], [0, 0, 1, 1], [], []>} : vector<8x32xf32>, vector<32x128xf32>, vector<8x128xf32> -> vector<8x128xf32>
    %c0_32 = arith.constant 0 : index
    %c0_33 = arith.constant 0 : index
    %82 = vector.load %arg10[%c0_32, %c0_33] : memref<1x128xf32, #tpu.memory_space<vmem>>, vector<1x128xf32>
    %83 = vector.broadcast %82 : vector<1x128xf32> to vector<8x128xf32>
    %84 = arith.addf %81, %83 : vector<8x128xf32>
    %c0_34 = arith.constant 0 : index
    %c0_35 = arith.constant 0 : index
    %85 = vector.load %arg11[%c0_34, %c0_35] : memref<8x128xf32, #tpu.memory_space<vmem>>, vector<8x128xf32>
    tpu.vector_store %arg11[%c0_34, %c0_35], %84 {strides = array<i32>} : memref<8x128xf32, #tpu.memory_space<vmem>>, vector<8x128xf32>,
    return
  }
  func.func @transform_0(%arg0: i32) -> (i32, i32, i32) {
    %c0_i32 = arith.constant 0 : i32
    %c0_i32_0 = arith.constant 0 : i32
    %c0_i32_1 = arith.constant 0 : i32
    return %arg0, %c0_i32, %c0_i32_0 : i32, i32, i32
  }
  func.func @transform_1(%arg0: i32) -> (i32, i32) {
    %c0_i32 = arith.constant 0 : i32
    %c0_i32_0 = arith.constant 0 : i32
    %c0_i32_1 = arith.constant 0 : i32
    return %c0_i32, %c0_i32_0 : i32, i32
  }
  func.func @transform_2(%arg0: i32) -> (i32, i32) {
    %c0_i32 = arith.constant 0 : i32
    %c0_i32_0 = arith.constant 0 : i32
    %c0_i32_1 = arith.constant 0 : i32
    return %c0_i32, %c0_i32_0 : i32, i32
  }
  func.func @transform_3(%arg0: i32) -> (i32, i32) {
    %c0_i32 = arith.constant 0 : i32
    %c0_i32_0 = arith.constant 0 : i32
    %c0_i32_1 = arith.constant 0 : i32
    return %c0_i32, %c0_i32_0 : i32, i32
  }
  func.func @transform_4(%arg0: i32) -> (i32, i32) {
    %c0_i32 = arith.constant 0 : i32
    %c0_i32_0 = arith.constant 0 : i32
    %c0_i32_1 = arith.constant 0 : i32
    return %c0_i32, %c0_i32_0 : i32, i32
  }
  func.func @transform_5(%arg0: i32) -> (i32, i32) {
    %c0_i32 = arith.constant 0 : i32
    %c0_i32_0 = arith.constant 0 : i32
    %c0_i32_1 = arith.constant 0 : i32
    return %c0_i32, %c0_i32_0 : i32, i32
  }
  func.func @transform_6(%arg0: i32) -> (i32, i32) {
    %c0_i32 = arith.constant 0 : i32
    %c0_i32_0 = arith.constant 0 : i32
    %c0_i32_1 = arith.constant 0 : i32
    return %c0_i32, %c0_i32_0 : i32, i32
  }
  func.func @transform_7(%arg0: i32) -> (i32, i32) {
    %c0_i32 = arith.constant 0 : i32
    %c0_i32_0 = arith.constant 0 : i32
    %c0_i32_1 = arith.constant 0 : i32
    return %c0_i32, %c0_i32_0 : i32, i32
  }
  func.func @transform_8(%arg0: i32) -> (i32, i32) {
    %c0_i32 = arith.constant 0 : i32
    %c0_i32_0 = arith.constant 0 : i32
    %c0_i32_1 = arith.constant 0 : i32
    return %c0_i32, %c0_i32_0 : i32, i32
  }
  func.func @transform_9(%arg0: i32) -> (i32, i32) {
    %c0_i32 = arith.constant 0 : i32
    %c0_i32_0 = arith.constant 0 : i32
    %c0_i32_1 = arith.constant 0 : i32
    return %c0_i32, %c0_i32_0 : i32, i32
  }
  func.func @transform_10(%arg0: i32) -> (i32, i32) {
    %c0_i32 = arith.constant 0 : i32
    %c0_i32_0 = arith.constant 0 : i32
    return %arg0, %c0_i32 : i32, i32
  }
}

</mosaic_0001>

<llo_original>
// kernel: crnn_forward.1
$region0: #{crnn_forward.1}
  #allocation0 [shape = 'u32[]', space=smem, size = 0x4, offset = 0x4, fixed_abs, tag = 'smem constant byte address 0x4 - core index']
  #allocation1 [shape = 'u32[144,128]{1,0:T(1,128)}', space=vmem, size = 0x12000, scoped, tag = 'internal scratch']
  %s0 = inlined_call_operand.vmem [shape: f32[8,16,16], index: 0, kind: input, shape index: {}]
  %s1 = inlined_call_operand.vmem [shape: f32[80,256], index: 1, kind: input, shape index: {}]
  %s2 = inlined_call_operand.hbm [shape: f32[1,256], index: 2, kind: input, shape index: {}]
  %s3 = inlined_call_operand.hbm [shape: f32[240,256], index: 3, kind: input, shape index: {}]
  %s4 = inlined_call_operand.vmem [shape: f32[1,256], index: 4, kind: input, shape index: {}]
  %s5 = inlined_call_operand.hbm [shape: f32[48,512], index: 5, kind: input, shape index: {}]
  %s6 = inlined_call_operand.vmem [shape: f32[1,512], index: 6, kind: input, shape index: {}]
  %s7 = inlined_call_operand.hbm [shape: f32[32,32], index: 7, kind: input, shape index: {}]
  %s8 = inlined_call_operand.hbm [shape: f32[32,128], index: 8, kind: input, shape index: {}]
  %s9 = inlined_call_operand.vmem [shape: f32[1,128], index: 9, kind: input, shape index: {}]
  %s10 = inlined_call_operand.vmem [shape: f32[8,128], index: 10, kind: output, shape index: {}]
  %s11 = sld [smem:[#allocation0]]
  $region70: #{crnn_forward.1} parent=0
    _
  %s13 = ssub.s32 1, %s11
  %s14 = scalar_select 0, %s13, %s11
  $region1: #{crnn_forward.1} parent=0
    #allocation2 [shape = 'u8[1024]{0}', space=vmem, size = 0x400, scoped, tag = 'input window, operand 2, single buffered']
    #allocation3 [shape = 's32[1]{0}', space=sflag, size = 0x4, scoped, tag = 'scoped memory for crnn_forward.1']
    #allocation4 [shape = 'u8[245760]{0}', space=vmem, size = 0x3c000, scoped, tag = 'input window, operand 3, single buffered']
    #allocation5 [shape = 's32[1]{0}', space=sflag, size = 0x4, scoped, tag = 'scoped memory for crnn_forward.1']
    #allocation6 [shape = 'u8[98304]{0}', space=vmem, size = 0x18000, scoped, tag = 'input window, operand 5, single buffered']
    #allocation7 [shape = 'u8[16384]{0}', space=vmem, size = 0x4000, scoped, tag = 'input window, operand 7, single buffered']
    #allocation8 [shape = 's32[1]{0}', space=sflag, size = 0x4, scoped, tag = 'scoped memory for crnn_forward.1']
    #allocation9 [shape = 'u8[16384]{0}', space=vmem, size = 0x4000, scoped, tag = 'input window, operand 8, single buffered']
    %15 = vsyncpa [#allocation3], 0
    %16 = vsyncpa [#allocation5], 0
    %17 = vsyncpa [#allocation8], 0
    // Predicated region
    $region2: #{crnn_forward.1} parent=1 // pred_check
      _
    $region3: #{crnn_forward.1} parent=1 // pred_check_branch
      %19 = sbr.rel (0) target = $region5
    $region4: #{crnn_forward.1} parent=1 // pred_region
      _
    $region5: #{crnn_forward.1} parent=1 // pred_fallthru
      _
    // Predicated region
    $region6: #{crnn_forward.1} parent=1 // pred_check
      _
    $region7: #{crnn_forward.1} parent=1 // pred_check_branch
      %21 = sbr.rel (0) target = $region9
    $region8: #{crnn_forward.1} parent=1 // pred_region
      _
    $region9: #{crnn_forward.1} parent=1 // pred_fallthru
      _
    // Predicated region
    $region10: #{crnn_forward.1} parent=1 // pred_check
      _
    $region11: #{crnn_forward.1} parent=1 // pred_check_branch
      %23 = sbr.rel (0) target = $region13
    $region12: #{crnn_forward.1} parent=1 // pred_region
      %s25 = ssub.s32 32, 32
      %26 = vsyncadd [#allocation3], %s25
      %s28 = sshll.u32 [#allocation2], 4
      %s29 = int_to_ptr.vmem [resolvable:$true] %s28
      %31 = dma.hbm_to_vmem [thread:$0]  %s2, 32, %s29, [#allocation3]
    $region13: #{crnn_forward.1} parent=1 // pred_fallthru
      _
    // Predicated region
    $region14: #{crnn_forward.1} parent=1 // pred_check
      _
    $region15: #{crnn_forward.1} parent=1 // pred_check_branch
      %33 = sbr.rel (0) target = $region17
    $region16: #{crnn_forward.1} parent=1 // pred_region
      %s35 = ssub.s32 7680, 7680
      %36 = vsyncadd [#allocation5], %s35
      %s37 = sshll.u32 [#allocation4], 4
      %s38 = int_to_ptr.vmem [resolvable:$true] %s37
      %43 = dma.hbm_to_vmem [thread:$0]  %s3, 7680, %s38, [#allocation5], 256, 256, 16
    $region17: #{crnn_forward.1} parent=1 // pred_fallthru
      _
    // Predicated region
    $region18: #{crnn_forward.1} parent=1 // pred_check
      _
    $region19: #{crnn_forward.1} parent=1 // pred_check_branch
      %45 = sbr.rel (0) target = $region21
    $region20: #{crnn_forward.1} parent=1 // pred_region
      _
    $region21: #{crnn_forward.1} parent=1 // pred_fallthru
      _
    // Predicated region
    $region22: #{crnn_forward.1} parent=1 // pred_check
      _
    $region23: #{crnn_forward.1} parent=1 // pred_check_branch
      %47 = sbr.rel (0) target = $region25
    $region24: #{crnn_forward.1} parent=1 // pred_region
      %s49 = ssub.s32 3072, 3072
      %50 = vsyncadd [#allocation5], %s49
      %s51 = sshll.u32 [#allocation6], 4
      %s52 = int_to_ptr.vmem [resolvable:$true] %s51
      %57 = dma.hbm_to_vmem [thread:$0]  %s5, 3072, %s52, [#allocation5], 512, 512, 32
    $region25: #{crnn_forward.1} parent=1 // pred_fallthru
      _
    // Predicated region
    $region26: #{crnn_forward.1} parent=1 // pred_check
      _
    $region27: #{crnn_forward.1} parent=1 // pred_check_branch
      %59 = sbr.rel (0) target = $region29
    $region28: #{crnn_forward.1} parent=1 // pred_region
      _
    $region29: #{crnn_forward.1} parent=1 // pred_fallthru
      _
    // Predicated region
    $region30: #{crnn_forward.1} parent=1 // pred_check
      _
    $region31: #{crnn_forward.1} parent=1 // pred_check_branch
      %61 = sbr.rel (0) target = $region33
    $region32: #{crnn_forward.1} parent=1 // pred_region
      %s63 = ssub.s32 512, 512
      %64 = vsyncadd [#allocation8], %s63
      %s65 = sshll.u32 [#allocation7], 4
      %s66 = int_to_ptr.vmem [resolvable:$true] %s65
      %71 = dma.hbm_to_vmem [thread:$0]  %s7, 512, %s66, [#allocation8], 128, 128, 8
    $region33: #{crnn_forward.1} parent=1 // pred_fallthru
      _
    // Predicated region
    $region34: #{crnn_forward.1} parent=1 // pred_check
      _
    $region35: #{crnn_forward.1} parent=1 // pred_check_branch
      %73 = sbr.rel (0) target = $region37
    $region36: #{crnn_forward.1} parent=1 // pred_region
      %s75 = ssub.s32 512, 512
      %76 = vsyncadd [#allocation8], %s75
      %s77 = sshll.u32 [#allocation9], 4
      %s78 = int_to_ptr.vmem [resolvable:$true] %s77
      %83 = dma.hbm_to_vmem [thread:$0]  %s8, 512, %s78, [#allocation8], 128, 128, 8
    $region37: #{crnn_forward.1} parent=1 // pred_fallthru
      _
    // Predicated region
    $region38: #{crnn_forward.1} parent=1 // pred_check
      _
    $region39: #{crnn_forward.1} parent=1 // pred_check_branch
      %85 = sbr.rel (0) target = $region41
    $region40: #{crnn_forward.1} parent=1 // pred_region
      _
    $region41: #{crnn_forward.1} parent=1 // pred_fallthru
      _
    // Predicated region
    $region42: #{crnn_forward.1} parent=1 // pred_check
      _
    $region43: #{crnn_forward.1} parent=1 // pred_check_branch
      %87 = sbr.rel (0) target = $region45
    $region44: #{crnn_forward.1} parent=1 // pred_region
      %88 = dma.done [#allocation3], 32
    $region45: #{crnn_forward.1} parent=1 // pred_fallthru
      _
    // Predicated region
    $region46: #{crnn_forward.1} parent=1 // pred_check
      _
    $region47: #{crnn_forward.1} parent=1 // pred_check_branch
      %90 = sbr.rel (0) target = $region49
    $region48: #{crnn_forward.1} parent=1 // pred_region
      %91 = dma.done [#allocation5], 7680
    $region49: #{crnn_forward.1} parent=1 // pred_fallthru
      _
    // Predicated region
    $region50: #{crnn_forward.1} parent=1 // pred_check
      _
    $region51: #{crnn_forward.1} parent=1 // pred_check_branch
      %93 = sbr.rel (0) target = $region53
    $region52: #{crnn_forward.1} parent=1 // pred_region
      %94 = dma.done [#allocation5], 3072
    $region53: #{crnn_forward.1} parent=1 // pred_fallthru
      _
    // Predicated region
    $region54: #{crnn_forward.1} parent=1 // pred_check
      _
    $region55: #{crnn_forward.1} parent=1 // pred_check_branch
      %96 = sbr.rel (0) target = $region57
    $region56: #{crnn_forward.1} parent=1 // pred_region
      %97 = dma.done [#allocation8], 512
    $region57: #{crnn_forward.1} parent=1 // pred_fallthru
      _
    // Predicated region
    $region58: #{crnn_forward.1} parent=1 // pred_check
      _
    $region59: #{crnn_forward.1} parent=1 // pred_check_branch
      %99 = sbr.rel (0) target = $region61
    $region60: #{crnn_forward.1} parent=1 // pred_region
      %100 = dma.done [#allocation8], 512
    $region61: #{crnn_forward.1} parent=1 // pred_fallthru
      _
    %v101 = vld [vmem:[%s0] sm:$0xff]
    %v102 = vld [vmem:[%s0 + $0x8] sm:$0xff]
    %v103 = vld [vmem:[%s0 + $0x10] sm:$0xff]
    %v104 = vld [vmem:[%s0 + $0x18] sm:$0xff]
    %v105 = vld [vmem:[%s0 + $0x20] sm:$0xff]
    %v106 = vld [vmem:[%s0 + $0x28] sm:$0xff]
    %v107 = vld [vmem:[%s0 + $0x30] sm:$0xff]
    %v108 = vld [vmem:[%s0 + $0x38] sm:$0xff]
    %v109 = vld [vmem:[%s0 + $0x40] sm:$0xff]
    %v110 = vld [vmem:[%s0 + $0x48] sm:$0xff]
    %v111 = vld [vmem:[%s0 + $0x50] sm:$0xff]
    %v112 = vld [vmem:[%s0 + $0x58] sm:$0xff]
    %v113 = vld [vmem:[%s0 + $0x60] sm:$0xff]
    %v114 = vld [vmem:[%s0 + $0x68] sm:$0xff]
    %v115 = vld [vmem:[%s0 + $0x70] sm:$0xff]
    %v116 = vld [vmem:[%s0 + $0x78] sm:$0xff]
    %vm133 = vcmask 1046528
    %v134 = vrot.slane %v101, 1
    %v135 = vrot.slane %v102, 1
    %v136 = vsel %vm133, %v134, %v135
    %v137 = vrot.slane %v103, 1
    %v138 = vrot.slane %v104, 1
    %v139 = vsel %vm133, %v137, %v138
    %v140 = vrot.slane %v105, 1
    %v141 = vrot.slane %v106, 1
    %v142 = vsel %vm133, %v140, %v141
    %v143 = vrot.slane %v107, 1
    %v144 = vrot.slane %v108, 1
    %v145 = vsel %vm133, %v143, %v144
    %v146 = vrot.slane %v109, 1
    %v147 = vrot.slane %v110, 1
    %v148 = vsel %vm133, %v146, %v147
    %v149 = vrot.slane %v111, 1
    %v150 = vrot.slane %v112, 1
    %v151 = vsel %vm133, %v149, %v150
    %v152 = vrot.slane %v113, 1
    %v153 = vrot.slane %v114, 1
    %v154 = vsel %vm133, %v152, %v153
    %v155 = vrot.slane %v115, 1
    %v156 = vrot.slane %v116, 1
    %v157 = vsel %vm133, %v155, %v156
    %158 = vrot.lane.b32.xlu0 %v136, 16
    %v159 = vpop.permute.xlu0 %158
    %160 = vrot.lane.b32.xlu0 %v135, 16
    %v161 = vpop.permute.xlu0 %160
    %162 = vrot.lane.b32.xlu0 %v139, 16
    %v163 = vpop.permute.xlu0 %162
    %164 = vrot.lane.b32.xlu0 %v138, 16
    %v165 = vpop.permute.xlu0 %164
    %166 = vrot.lane.b32.xlu0 %v142, 16
    %v167 = vpop.permute.xlu0 %166
    %168 = vrot.lane.b32.xlu0 %v141, 16
    %v169 = vpop.permute.xlu0 %168
    %170 = vrot.lane.b32.xlu0 %v145, 16
    %v171 = vpop.permute.xlu0 %170
    %172 = vrot.lane.b32.xlu0 %v144, 16
    %v173 = vpop.permute.xlu0 %172
    %174 = vrot.lane.b32.xlu0 %v148, 16
    %v175 = vpop.permute.xlu0 %174
    %176 = vrot.lane.b32.xlu0 %v147, 16
    %v177 = vpop.permute.xlu0 %176
    %178 = vrot.lane.b32.xlu0 %v151, 16
    %v179 = vpop.permute.xlu0 %178
    %180 = vrot.lane.b32.xlu0 %v150, 16
    %v181 = vpop.permute.xlu0 %180
    %182 = vrot.lane.b32.xlu0 %v154, 16
    %v183 = vpop.permute.xlu0 %182
    %184 = vrot.lane.b32.xlu0 %v153, 16
    %v185 = vpop.permute.xlu0 %184
    %186 = vrot.lane.b32.xlu0 %v157, 16
    %v187 = vpop.permute.xlu0 %186
    %188 = vrot.lane.b32.xlu0 %v156, 16
    %v189 = vpop.permute.xlu0 %188
    %vm206 = vcmask 1045504
    %v207 = vrot.slane %v101, 2
    %v208 = vrot.slane %v102, 2
    %v209 = vsel %vm206, %v207, %v208
    %v210 = vrot.slane %v103, 2
    %v211 = vrot.slane %v104, 2
    %v212 = vsel %vm206, %v210, %v211
    %v213 = vrot.slane %v105, 2
    %v214 = vrot.slane %v106, 2
    %v215 = vsel %vm206, %v213, %v214
    %v216 = vrot.slane %v107, 2
    %v217 = vrot.slane %v108, 2
    %v218 = vsel %vm206, %v216, %v217
    %v219 = vrot.slane %v109, 2
    %v220 = vrot.slane %v110, 2
    %v221 = vsel %vm206, %v219, %v220
    %v222 = vrot.slane %v111, 2
    %v223 = vrot.slane %v112, 2
    %v224 = vsel %vm206, %v222, %v223
    %v225 = vrot.slane %v113, 2
    %v226 = vrot.slane %v114, 2
    %v227 = vsel %vm206, %v225, %v226
    %v228 = vrot.slane %v115, 2
    %v229 = vrot.slane %v116, 2
    %v230 = vsel %vm206, %v228, %v229
    %231 = vrot.lane.b32.xlu0 %v209, 32
    %v232 = vpop.permute.xlu0 %231
    %233 = vrot.lane.b32.xlu0 %v208, 32
    %v234 = vpop.permute.xlu0 %233
    %235 = vrot.lane.b32.xlu0 %v212, 32
    %v236 = vpop.permute.xlu0 %235
    %237 = vrot.lane.b32.xlu0 %v211, 32
    %v238 = vpop.permute.xlu0 %237
    %239 = vrot.lane.b32.xlu0 %v215, 32
    %v240 = vpop.permute.xlu0 %239
    %241 = vrot.lane.b32.xlu0 %v214, 32
    %v242 = vpop.permute.xlu0 %241
    %243 = vrot.lane.b32.xlu0 %v218, 32
    %v244 = vpop.permute.xlu0 %243
    %245 = vrot.lane.b32.xlu0 %v217, 32
    %v246 = vpop.permute.xlu0 %245
    %247 = vrot.lane.b32.xlu0 %v221, 32
    %v248 = vpop.permute.xlu0 %247
    %249 = vrot.lane.b32.xlu0 %v220, 32
    %v250 = vpop.permute.xlu0 %249
    %251 = vrot.lane.b32.xlu0 %v224, 32
    %v252 = vpop.permute.xlu0 %251
    %253 = vrot.lane.b32.xlu0 %v223, 32
    %v254 = vpop.permute.xlu0 %253
    %255 = vrot.lane.b32.xlu0 %v227, 32
    %v256 = vpop.permute.xlu0 %255
    %257 = vrot.lane.b32.xlu0 %v226, 32
    %v258 = vpop.permute.xlu0 %257
    %259 = vrot.lane.b32.xlu0 %v230, 32
    %v260 = vpop.permute.xlu0 %259
    %261 = vrot.lane.b32.xlu0 %v229, 32
    %v262 = vpop.permute.xlu0 %261
    %vm279 = vcmask 1044480
    %v280 = vrot.slane %v101, 3
    %v281 = vrot.slane %v102, 3
    %v282 = vsel %vm279, %v280, %v281
    %v283 = vrot.slane %v103, 3
    %v284 = vrot.slane %v104, 3
    %v285 = vsel %vm279, %v283, %v284
    %v286 = vrot.slane %v105, 3
    %v287 = vrot.slane %v106, 3
    %v288 = vsel %vm279, %v286, %v287
    %v289 = vrot.slane %v107, 3
    %v290 = vrot.slane %v108, 3
    %v291 = vsel %vm279, %v289, %v290
    %v292 = vrot.slane %v109, 3
    %v293 = vrot.slane %v110, 3
    %v294 = vsel %vm279, %v292, %v293
    %v295 = vrot.slane %v111, 3
    %v296 = vrot.slane %v112, 3
    %v297 = vsel %vm279, %v295, %v296
    %v298 = vrot.slane %v113, 3
    %v299 = vrot.slane %v114, 3
    %v300 = vsel %vm279, %v298, %v299
    %v301 = vrot.slane %v115, 3
    %v302 = vrot.slane %v116, 3
    %v303 = vsel %vm279, %v301, %v302
    %304 = vrot.lane.b32.xlu0 %v282, 48
    %v305 = vpop.permute.xlu0 %304
    %306 = vrot.lane.b32.xlu0 %v281, 48
    %v307 = vpop.permute.xlu0 %306
    %308 = vrot.lane.b32.xlu0 %v285, 48
    %v309 = vpop.permute.xlu0 %308
    %310 = vrot.lane.b32.xlu0 %v284, 48
    %v311 = vpop.permute.xlu0 %310
    %312 = vrot.lane.b32.xlu0 %v288, 48
    %v313 = vpop.permute.xlu0 %312
    %314 = vrot.lane.b32.xlu0 %v287, 48
    %v315 = vpop.permute.xlu0 %314
    %316 = vrot.lane.b32.xlu0 %v291, 48
    %v317 = vpop.permute.xlu0 %316
    %318 = vrot.lane.b32.xlu0 %v290, 48
    %v319 = vpop.permute.xlu0 %318
    %320 = vrot.lane.b32.xlu0 %v294, 48
    %v321 = vpop.permute.xlu0 %320
    %322 = vrot.lane.b32.xlu0 %v293, 48
    %v323 = vpop.permute.xlu0 %322
    %324 = vrot.lane.b32.xlu0 %v297, 48
    %v325 = vpop.permute.xlu0 %324
    %326 = vrot.lane.b32.xlu0 %v296, 48
    %v327 = vpop.permute.xlu0 %326
    %328 = vrot.lane.b32.xlu0 %v300, 48
    %v329 = vpop.permute.xlu0 %328
    %330 = vrot.lane.b32.xlu0 %v299, 48
    %v331 = vpop.permute.xlu0 %330
    %332 = vrot.lane.b32.xlu0 %v303, 48
    %v333 = vpop.permute.xlu0 %332
    %334 = vrot.lane.b32.xlu0 %v302, 48
    %v335 = vpop.permute.xlu0 %334
    %vm352 = vcmask 1043456
    %v353 = vrot.slane %v101, 4
    %v354 = vrot.slane %v102, 4
    %v355 = vsel %vm352, %v353, %v354
    %v356 = vrot.slane %v103, 4
    %v357 = vrot.slane %v104, 4
    %v358 = vsel %vm352, %v356, %v357
    %v359 = vrot.slane %v105, 4
    %v360 = vrot.slane %v106, 4
    %v361 = vsel %vm352, %v359, %v360
    %v362 = vrot.slane %v107, 4
    %v363 = vrot.slane %v108, 4
    %v364 = vsel %vm352, %v362, %v363
    %v365 = vrot.slane %v109, 4
    %v366 = vrot.slane %v110, 4
    %v367 = vsel %vm352, %v365, %v366
    %v368 = vrot.slane %v111, 4
    %v369 = vrot.slane %v112, 4
    %v370 = vsel %vm352, %v368, %v369
    %v371 = vrot.slane %v113, 4
    %v372 = vrot.slane %v114, 4
    %v373 = vsel %vm352, %v371, %v372
    %v374 = vrot.slane %v115, 4
    %v375 = vrot.slane %v116, 4
    %v376 = vsel %vm352, %v374, %v375
    %377 = vrot.lane.b32.xlu0 %v355, 64
    %v378 = vpop.permute.xlu0 %377
    %379 = vrot.lane.b32.xlu0 %v354, 64
    %v380 = vpop.permute.xlu0 %379
    %381 = vrot.lane.b32.xlu0 %v358, 64
    %v382 = vpop.permute.xlu0 %381
    %383 = vrot.lane.b32.xlu0 %v357, 64
    %v384 = vpop.permute.xlu0 %383
    %385 = vrot.lane.b32.xlu0 %v361, 64
    %v386 = vpop.permute.xlu0 %385
    %387 = vrot.lane.b32.xlu0 %v360, 64
    %v388 = vpop.permute.xlu0 %387
    %389 = vrot.lane.b32.xlu0 %v364, 64
    %v390 = vpop.permute.xlu0 %389
    %391 = vrot.lane.b32.xlu0 %v363, 64
    %v392 = vpop.permute.xlu0 %391
    %393 = vrot.lane.b32.xlu0 %v367, 64
    %v394 = vpop.permute.xlu0 %393
    %395 = vrot.lane.b32.xlu0 %v366, 64
    %v396 = vpop.permute.xlu0 %395
    %397 = vrot.lane.b32.xlu0 %v370, 64
    %v398 = vpop.permute.xlu0 %397
    %399 = vrot.lane.b32.xlu0 %v369, 64
    %v400 = vpop.permute.xlu0 %399
    %401 = vrot.lane.b32.xlu0 %v373, 64
    %v402 = vpop.permute.xlu0 %401
    %403 = vrot.lane.b32.xlu0 %v372, 64
    %v404 = vpop.permute.xlu0 %403
    %405 = vrot.lane.b32.xlu0 %v376, 64
    %v406 = vpop.permute.xlu0 %405
    %407 = vrot.lane.b32.xlu0 %v375, 64
    %v408 = vpop.permute.xlu0 %407
    %vm425 = vcmask 130048
    %v426 = vsel %vm425, %v101, %v159
    %v427 = vsel %vm425, %v102, %v161
    %v428 = vsel %vm425, %v103, %v163
    %v429 = vsel %vm425, %v104, %v165
    %v430 = vsel %vm425, %v105, %v167
    %v431 = vsel %vm425, %v106, %v169
    %v432 = vsel %vm425, %v107, %v171
    %v433 = vsel %vm425, %v108, %v173
    %v434 = vsel %vm425, %v109, %v175
    %v435 = vsel %vm425, %v110, %v177
    %v436 = vsel %vm425, %v111, %v179
    %v437 = vsel %vm425, %v112, %v181
    %v438 = vsel %vm425, %v113, %v183
    %v439 = vsel %vm425, %v114, %v185
    %v440 = vsel %vm425, %v115, %v187
    %v441 = vsel %vm425, %v116, %v189
    %vm442 = vcmask 261120
    %v443 = vsel %vm442, %v426, %v232
    %v444 = vsel %vm442, %v427, %v234
    %v445 = vsel %vm442, %v428, %v236
    %v446 = vsel %vm442, %v429, %v238
    %v447 = vsel %vm442, %v430, %v240
    %v448 = vsel %vm442, %v431, %v242
    %v449 = vsel %vm442, %v432, %v244
    %v450 = vsel %vm442, %v433, %v246
    %v451 = vsel %vm442, %v434, %v248
    %v452 = vsel %vm442, %v435, %v250
    %v453 = vsel %vm442, %v436, %v252
    %v454 = vsel %vm442, %v437, %v254
    %v455 = vsel %vm442, %v438, %v256
    %v456 = vsel %vm442, %v439, %v258
    %v457 = vsel %vm442, %v440, %v260
    %v458 = vsel %vm442, %v441, %v262
    %vm459 = vcmask 392192
    %v460 = vsel %vm459, %v443, %v305
    %v461 = vsel %vm459, %v444, %v307
    %v462 = vsel %vm459, %v445, %v309
    %v463 = vsel %vm459, %v446, %v311
    %v464 = vsel %vm459, %v447, %v313
    %v465 = vsel %vm459, %v448, %v315
    %v466 = vsel %vm459, %v449, %v317
    %v467 = vsel %vm459, %v450, %v319
    %v468 = vsel %vm459, %v451, %v321
    %v469 = vsel %vm459, %v452, %v323
    %v470 = vsel %vm459, %v453, %v325
    %v471 = vsel %vm459, %v454, %v327
    %v472 = vsel %vm459, %v455, %v329
    %v473 = vsel %vm459, %v456, %v331
    %v474 = vsel %vm459, %v457, %v333
    %v475 = vsel %vm459, %v458, %v335
    %vm476 = vcmask 523264
    %v477 = vsel %vm476, %v460, %v378
    %v478 = vsel %vm476, %v461, %v380
    %v479 = vsel %vm476, %v462, %v382
    %v480 = vsel %vm476, %v463, %v384
    %v481 = vsel %vm476, %v464, %v386
    %v482 = vsel %vm476, %v465, %v388
    %v483 = vsel %vm476, %v466, %v390
    %v484 = vsel %vm476, %v467, %v392
    %v485 = vsel %vm476, %v468, %v394
    %v486 = vsel %vm476, %v469, %v396
    %v487 = vsel %vm476, %v470, %v398
    %v488 = vsel %vm476, %v471, %v400
    %v489 = vsel %vm476, %v472, %v402
    %v490 = vsel %vm476, %v473, %v404
    %v491 = vsel %vm476, %v474, %v406
    %v492 = vsel %vm476, %v475, %v408
    %v509 = vcombine.high %v477, %v477
    %v510 = vcombine.high %v479, %v479
    %v511 = vcombine.high %v481, %v481
    %v512 = vcombine.high %v483, %v483
    %v513 = vcombine.high %v485, %v485
    %v514 = vcombine.high %v487, %v487
    %v515 = vcombine.high %v489, %v489
    %v516 = vcombine.high %v491, %v491
    %v517 = vld [vmem:[%s1] sm:$0xff]
    %v518 = vld [vmem:[%s1 + $0x8] sm:$0xff]
    %v519 = vld [vmem:[%s1 + $0x10] sm:$0xff]
    %v520 = vld [vmem:[%s1 + $0x18] sm:$0xff]
    %v521 = vld [vmem:[%s1 + $0x20] sm:$0xff]
    %v522 = vld [vmem:[%s1 + $0x28] sm:$0xff]
    %v523 = vld [vmem:[%s1 + $0x30] sm:$0xff]
    %v524 = vld [vmem:[%s1 + $0x38] sm:$0xff]
    %v525 = vld [vmem:[%s1 + $0x40] sm:$0xff]
    %v526 = vld [vmem:[%s1 + $0x48] sm:$0xff]
    %v527 = vld [vmem:[%s1 + $0x50] sm:$0xff]
    %v528 = vld [vmem:[%s1 + $0x58] sm:$0xff]
    %v529 = vld [vmem:[%s1 + $0x60] sm:$0xff]
    %v530 = vld [vmem:[%s1 + $0x68] sm:$0xff]
    %v531 = vld [vmem:[%s1 + $0x70] sm:$0xff]
    %v532 = vld [vmem:[%s1 + $0x78] sm:$0xff]
    %v533 = vld [vmem:[%s1 + $0x80] sm:$0xff]
    %v534 = vld [vmem:[%s1 + $0x88] sm:$0xff]
    %v535 = vld [vmem:[%s1 + $0x90] sm:$0xff]
    %v536 = vld [vmem:[%s1 + $0x98] sm:$0xff]
    %v537 = vld [vmem:[#allocation2] sm:$0x3]
    %v539 = vlaneseq
    %v540 = vshrl.u32 %v539, 7
    %v541 = vsub.s32 0, %v540
    %v542 = vrot.slane %v537, %v541
    %v543 = vlaneseq
    %v544 = vshrl.u32 %v543, 7
    %v545 = vsub.s32 1, %v544
    %v546 = vrot.slane %v537, %v545
    %v549 = vcombine.low %v477, %v509
    %v550 = vcombine.low %v478, %v479
    %v551 = vcombine.low %v510, %v480
    %v552 = vcombine.low %v481, %v511
    %v553 = vcombine.low %v482, %v483
    %v554 = vcombine.low %v512, %v484
    %v555 = vcombine.low %v485, %v513
    %v556 = vcombine.low %v486, %v487
    %v557 = vcombine.low %v514, %v488
    %v558 = vcombine.low %v489, %v515
    %v559 = vcombine.low %v490, %v491
    %v560 = vcombine.low %v516, %v492
    %vm561 = vcmask 654336
    %v562 = vsel %vm561, %v549, 0
    %v564 = vsel %vm561, %v550, 0
    %v566 = vsel %vm561, %v551, 0
    %v568 = vsel %vm561, %v552, 0
    %v570 = vsel %vm561, %v553, 0
    %v572 = vsel %vm561, %v554, 0
    %v574 = vsel %vm561, %v555, 0
    %v576 = vsel %vm561, %v556, 0
    %v578 = vsel %vm561, %v557, 0
    %v580 = vsel %vm561, %v558, 0
    %v582 = vsel %vm561, %v559, 0
    %v584 = vsel %vm561, %v560, 0
    %586 = vmatprep.subr.mxu0 0.0
    %587 = vmatpush1.msra.mxu0 0.0
    %588 = vmatprep.subr.mxu0 0.0
    %589 = vmatpush1.msra.mxu0 0.0
    %590 = vmatprep.subr.mxu0 0.0
    %591 = vmatpush1.msra.mxu0 0.0
    %592 = vmatprep.subr.mxu0 0.0
    %593 = vmatpush1.msra.mxu0 0.0
    %594 = vmatprep.subr.mxu0 0.0
    %595 = vmatpush1.msra.mxu0 0.0
    %596 = vmatprep.subr.mxu0 0.0
    %597 = vmatpush1.msra.mxu0 0.0
    %598 = vmatprep.subr.mxu0 %v536
    %599 = vmatpush1.msra.mxu0 %v535
    %600 = vmatprep.subr.mxu0 %v534
    %601 = vmatpush1.msra.mxu0 %v533
    %602 = vmatprep.subr.mxu0 %v532
    %603 = vmatpush1.msra.mxu0 %v531
    %604 = vmatprep.subr.mxu0 %v530
    %605 = vmatpush1.msra.mxu0 %v529
    %606 = vmatprep.subr.mxu0 %v528
    %607 = vmatpush1.msra.mxu0 %v527
    %608 = vmatprep.subr.mxu0 %v526
    %609 = vmatpush1.msra.mxu0 %v525
    %610 = vmatprep.subr.mxu0 %v524
    %611 = vmatpush1.msra.mxu0 %v523
    %612 = vmatprep.subr.mxu0 %v522
    %613 = vmatpush1.msra.mxu0 %v521
    %614 = vmatprep.subr.mxu0 %v520
    %615 = vmatpush1.msra.mxu0 %v519
    %616 = vmatprep.subr.mxu0 %v518
    %617 = vmatpush1.msra.mxu0 %v517
    %618 = vmatprep.subr.mxu0 0.0
    %619 = vmatpush2.msra.mxu0 0.0
    %620 = vmatprep.subr.mxu0 0.0
    %621 = vmatpush2.msra.mxu0 0.0
    %622 = vmatprep.subr.mxu0 0.0
    %623 = vmatpush2.msra.mxu0 0.0
    %624 = vmatprep.subr.mxu0 0.0
    %625 = vmatpush2.msra.mxu0 0.0
    %626 = vmatprep.subr.mxu0 0.0
    %627 = vmatpush2.msra.mxu0 0.0
    %628 = vmatprep.subr.mxu0 0.0
    %629 = vmatpush2.msra.mxu0 0.0
    %630 = vmatprep.subr.mxu0 0.0
    %631 = vmatpush2.msra.mxu0 0.0
    %632 = vmatprep.subr.mxu0 0.0
    %633 = vmatpush2.msra.mxu0 0.0
    %634 = vmatprep.subr.mxu0 0.0
    %635 = vmatpush2.msra.mxu0 0.0
    %636 = vmatprep.subr.mxu0 0.0
    %637 = vmatpush2.msra.mxu0 0.0
    %638 = vmatprep.subr.mxu0 0.0
    %639 = vmatpush2.msra.mxu0 0.0
    %640 = vmatprep.subr.mxu0 0.0
    %641 = vmatpush2.msra.mxu0 0.0
    %642 = vmatprep.subr.mxu0 0.0
    %643 = vmatpush2.msra.mxu0 0.0
    %644 = vmatprep.subr.mxu0 0.0
    %645 = vmatpush2.msra.mxu0 0.0
    %646 = vmatprep.subr.mxu0 0.0
    %647 = vmatpush2.msra.mxu0 0.0
    %648 = vmatprep.subr.mxu0 0.0
    %649 = vmatpush2.msra.mxu0 0.0
    %650 = vmatprep.mubr.f32.mxu0 0.0
    %651 = vmatmul.mubr.f32.gmra.mxu0 %v562
    %v652 = vpop.f32.mrf.mxu0
    %v653 = vadd.f32 %v542, %v652
    %v654 = vpop.f32.mrf.mxu0
    %v655 = vadd.f32 %v546, %v654
    %656 = vmatprep.mubr.f32.mxu0 0.0
    %657 = vmatmul.mubr.f32.gmra.mxu0 %v564
    %v658 = vpop.f32.mrf.mxu0
    %v659 = vadd.f32 %v542, %v658
    %v660 = vpop.f32.mrf.mxu0
    %v661 = vadd.f32 %v546, %v660
    %662 = vmatprep.mubr.f32.mxu0 0.0
    %663 = vmatmul.mubr.f32.gmra.mxu0 %v566
    %v664 = vpop.f32.mrf.mxu0
    %v665 = vadd.f32 %v542, %v664
    %v666 = vpop.f32.mrf.mxu0
    %v667 = vadd.f32 %v546, %v666
    %668 = vmatprep.mubr.f32.mxu0 0.0
    %669 = vmatmul.mubr.f32.gmra.mxu0 %v568
    %v670 = vpop.f32.mrf.mxu0
    %v671 = vadd.f32 %v542, %v670
    %v672 = vpop.f32.mrf.mxu0
    %v673 = vadd.f32 %v546, %v672
    %674 = vmatprep.mubr.f32.mxu0 0.0
    %675 = vmatmul.mubr.f32.gmra.mxu0 %v570
    %v676 = vpop.f32.mrf.mxu0
    %v677 = vadd.f32 %v542, %v676
    %v678 = vpop.f32.mrf.mxu0
    %v679 = vadd.f32 %v546, %v678
    %680 = vmatprep.mubr.f32.mxu0 0.0
    %681 = vmatmul.mubr.f32.gmra.mxu0 %v572
    %v682 = vpop.f32.mrf.mxu0
    %v683 = vadd.f32 %v542, %v682
    %v684 = vpop.f32.mrf.mxu0
    %v685 = vadd.f32 %v546, %v684
    %686 = vmatprep.mubr.f32.mxu0 0.0
    %687 = vmatmul.mubr.f32.gmra.mxu0 %v574
    %v688 = vpop.f32.mrf.mxu0
    %v689 = vadd.f32 %v542, %v688
    %v690 = vpop.f32.mrf.mxu0
    %v691 = vadd.f32 %v546, %v690
    %692 = vmatprep.mubr.f32.mxu0 0.0
    %693 = vmatmul.mubr.f32.gmra.mxu0 %v576
    %v694 = vpop.f32.mrf.mxu0
    %v695 = vadd.f32 %v542, %v694
    %v696 = vpop.f32.mrf.mxu0
    %v697 = vadd.f32 %v546, %v696
    %698 = vmatprep.mubr.f32.mxu0 0.0
    %699 = vmatmul.mubr.f32.gmra.mxu0 %v578
    %v700 = vpop.f32.mrf.mxu0
    %v701 = vadd.f32 %v542, %v700
    %v702 = vpop.f32.mrf.mxu0
    %v703 = vadd.f32 %v546, %v702
    %704 = vmatprep.mubr.f32.mxu0 0.0
    %705 = vmatmul.mubr.f32.gmra.mxu0 %v580
    %v706 = vpop.f32.mrf.mxu0
    %v707 = vadd.f32 %v542, %v706
    %v708 = vpop.f32.mrf.mxu0
    %v709 = vadd.f32 %v546, %v708
    %710 = vmatprep.mubr.f32.mxu0 0.0
    %711 = vmatmul.mubr.f32.gmra.mxu0 %v582
    %v712 = vpop.f32.mrf.mxu0
    %v713 = vadd.f32 %v542, %v712
    %v714 = vpop.f32.mrf.mxu0
    %v715 = vadd.f32 %v546, %v714
    %716 = vmatprep.mubr.f32.mxu0 0.0
    %717 = vmatmul.mubr.f32.gmra.mxu0 %v584
    %v718 = vpop.f32.mrf.mxu0
    %v719 = vadd.f32 %v542, %v718
    %v720 = vpop.f32.mrf.mxu0
    %v721 = vadd.f32 %v546, %v720
    %722 = vdwg.mxu0
    %v723 = vmul.f32 %v653, 0.5
    %v724 = vmul.f32 %v655, 0.5
    %v725 = vmul.f32 %v659, 0.5
    %v726 = vmul.f32 %v661, 0.5
    %v727 = vmul.f32 %v665, 0.5
    %v728 = vmul.f32 %v667, 0.5
    %v729 = vmul.f32 %v671, 0.5
    %v730 = vmul.f32 %v673, 0.5
    %v731 = vmul.f32 %v677, 0.5
    %v732 = vmul.f32 %v679, 0.5
    %v733 = vmul.f32 %v683, 0.5
    %v734 = vmul.f32 %v685, 0.5
    %v735 = vmul.f32 %v689, 0.5
    %v736 = vmul.f32 %v691, 0.5
    %v737 = vmul.f32 %v695, 0.5
    %v738 = vmul.f32 %v697, 0.5
    %v739 = vmul.f32 %v701, 0.5
    %v740 = vmul.f32 %v703, 0.5
    %v741 = vmul.f32 %v707, 0.5
    %v742 = vmul.f32 %v709, 0.5
    %v743 = vmul.f32 %v713, 0.5
    %v744 = vmul.f32 %v715, 0.5
    %v745 = vmul.f32 %v719, 0.5
    %v746 = vmul.f32 %v721, 0.5
    %v747 = vtanh.pop %v723
    %v748 = vtanh.pop %v724
    %v749 = vtanh.pop %v725
    %v750 = vtanh.pop %v726
    %v751 = vtanh.pop %v727
    %v752 = vtanh.pop %v728
    %v753 = vtanh.pop %v729
    %v754 = vtanh.pop %v730
    %v755 = vtanh.pop %v731
    %v756 = vtanh.pop %v732
    %v757 = vtanh.pop %v733
    %v758 = vtanh.pop %v734
    %v759 = vtanh.pop %v735
    %v760 = vtanh.pop %v736
    %v761 = vtanh.pop %v737
    %v762 = vtanh.pop %v738
    %v763 = vtanh.pop %v739
    %v764 = vtanh.pop %v740
    %v765 = vtanh.pop %v741
    %v766 = vtanh.pop %v742
    %v767 = vtanh.pop %v743
    %v768 = vtanh.pop %v744
    %v769 = vtanh.pop %v745
    %v770 = vtanh.pop %v746
    %v771 = vmul.f32 %v747, 0.5
    %v772 = vmul.f32 %v748, 0.5
    %v773 = vmul.f32 %v749, 0.5
    %v774 = vmul.f32 %v750, 0.5
    %v775 = vmul.f32 %v751, 0.5
    %v776 = vmul.f32 %v752, 0.5
    %v777 = vmul.f32 %v753, 0.5
    %v778 = vmul.f32 %v754, 0.5
    %v779 = vmul.f32 %v755, 0.5
    %v780 = vmul.f32 %v756, 0.5
    %v781 = vmul.f32 %v757, 0.5
    %v782 = vmul.f32 %v758, 0.5
    %v783 = vmul.f32 %v759, 0.5
    %v784 = vmul.f32 %v760, 0.5
    %v785 = vmul.f32 %v761, 0.5
    %v786 = vmul.f32 %v762, 0.5
    %v787 = vmul.f32 %v763, 0.5
    %v788 = vmul.f32 %v764, 0.5
    %v789 = vmul.f32 %v765, 0.5
    %v790 = vmul.f32 %v766, 0.5
    %v791 = vmul.f32 %v767, 0.5
    %v792 = vmul.f32 %v768, 0.5
    %v793 = vmul.f32 %v769, 0.5
    %v794 = vmul.f32 %v770, 0.5
    %v795 = vadd.f32 %v771, 0.5
    %v796 = vadd.f32 %v772, 0.5
    %v797 = vadd.f32 %v773, 0.5
    %v798 = vadd.f32 %v774, 0.5
    %v799 = vadd.f32 %v775, 0.5
    %v800 = vadd.f32 %v776, 0.5
    %v801 = vadd.f32 %v777, 0.5
    %v802 = vadd.f32 %v778, 0.5
    %v803 = vadd.f32 %v779, 0.5
    %v804 = vadd.f32 %v780, 0.5
    %v805 = vadd.f32 %v781, 0.5
    %v806 = vadd.f32 %v782, 0.5
    %v807 = vadd.f32 %v783, 0.5
    %v808 = vadd.f32 %v784, 0.5
    %v809 = vadd.f32 %v785, 0.5
    %v810 = vadd.f32 %v786, 0.5
    %v811 = vadd.f32 %v787, 0.5
    %v812 = vadd.f32 %v788, 0.5
    %v813 = vadd.f32 %v789, 0.5
    %v814 = vadd.f32 %v790, 0.5
    %v815 = vadd.f32 %v791, 0.5
    %v816 = vadd.f32 %v792, 0.5
    %v817 = vadd.f32 %v793, 0.5
    %v818 = vadd.f32 %v794, 0.5
    %v819 = vmax.f32 %v795, %v796
    %v820 = vmax.f32 %v797, %v798
    %v821 = vmax.f32 %v799, %v800
    %v822 = vmax.f32 %v801, %v802
    %v823 = vmax.f32 %v803, %v804
    %v824 = vmax.f32 %v805, %v806
    %v825 = vmax.f32 %v807, %v808
    %v826 = vmax.f32 %v809, %v810
    %v827 = vmax.f32 %v811, %v812
    %v828 = vmax.f32 %v813, %v814
    %v829 = vmax.f32 %v815, %v816
    %v830 = vmax.f32 %v817, %v818
    %v843 = vcombine.high %v819, %v819
    %v845 = vunpack.c.l.s4 1983009808
    %v846 = vunpack.c.0.s8 %v845
    %v847 = vlaneseq
    %v848 = vshrl.u32 %v847, 7
    %v849 = vsub.s32 %v846, %v848
    %v850 = vrot.slane %v819, %v849
    %v852 = vunpack.c.l.s4 1983009808
    %v853 = vunpack.c.0.s8 %v852
    %v854 = vlaneseq
    %v855 = vshrl.u32 %v854, 7
    %v856 = vsub.s32 %v853, %v855
    %v857 = vrot.slane %v843, %v856
    %v858 = vcombine.high %v850, %v850
    %v859 = vcombine.high %v857, %v857
    %v860 = vcombine.high %v820, %v820
    %v862 = vunpack.c.l.s4 1983009808
    %v863 = vunpack.c.0.s8 %v862
    %v864 = vlaneseq
    %v865 = vshrl.u32 %v864, 7
    %v866 = vsub.s32 %v863, %v865
    %v867 = vrot.slane %v820, %v866
    %v869 = vunpack.c.l.s4 1983009808
    %v870 = vunpack.c.0.s8 %v869
    %v871 = vlaneseq
    %v872 = vshrl.u32 %v871, 7
    %v873 = vsub.s32 %v870, %v872
    %v874 = vrot.slane %v860, %v873
    %v875 = vcombine.high %v867, %v867
    %v876 = vcombine.high %v874, %v874
    %v877 = vcombine.high %v821, %v821
    %v879 = vunpack.c.l.s4 1983009808
    %v880 = vunpack.c.0.s8 %v879
    %v881 = vlaneseq
    %v882 = vshrl.u32 %v881, 7
    %v883 = vsub.s32 %v880, %v882
    %v884 = vrot.slane %v821, %v883
    %v886 = vunpack.c.l.s4 1983009808
    %v887 = vunpack.c.0.s8 %v886
    %v888 = vlaneseq
    %v889 = vshrl.u32 %v888, 7
    %v890 = vsub.s32 %v887, %v889
    %v891 = vrot.slane %v877, %v890
    %v892 = vcombine.high %v884, %v884
    %v893 = vcombine.high %v891, %v891
    %v894 = vcombine.high %v822, %v822
    %v896 = vunpack.c.l.s4 1983009808
    %v897 = vunpack.c.0.s8 %v896
    %v898 = vlaneseq
    %v899 = vshrl.u32 %v898, 7
    %v900 = vsub.s32 %v897, %v899
    %v901 = vrot.slane %v822, %v900
    %v903 = vunpack.c.l.s4 1983009808
    %v904 = vunpack.c.0.s8 %v903
    %v905 = vlaneseq
    %v906 = vshrl.u32 %v905, 7
    %v907 = vsub.s32 %v904, %v906
    %v908 = vrot.slane %v894, %v907
    %v909 = vcombine.high %v901, %v901
    %v910 = vcombine.high %v908, %v908
    %v911 = vcombine.high %v823, %v823
    %v913 = vunpack.c.l.s4 1983009808
    %v914 = vunpack.c.0.s8 %v913
    %v915 = vlaneseq
    %v916 = vshrl.u32 %v915, 7
    %v917 = vsub.s32 %v914, %v916
    %v918 = vrot.slane %v823, %v917
    %v920 = vunpack.c.l.s4 1983009808
    %v921 = vunpack.c.0.s8 %v920
    %v922 = vlaneseq
    %v923 = vshrl.u32 %v922, 7
    %v924 = vsub.s32 %v921, %v923
    %v925 = vrot.slane %v911, %v924
    %v926 = vcombine.high %v918, %v918
    %v927 = vcombine.high %v925, %v925
    %v928 = vcombine.high %v824, %v824
    %v930 = vunpack.c.l.s4 1983009808
    %v931 = vunpack.c.0.s8 %v930
    %v932 = vlaneseq
    %v933 = vshrl.u32 %v932, 7
    %v934 = vsub.s32 %v931, %v933
    %v935 = vrot.slane %v824, %v934
    %v937 = vunpack.c.l.s4 1983009808
    %v938 = vunpack.c.0.s8 %v937
    %v939 = vlaneseq
    %v940 = vshrl.u32 %v939, 7
    %v941 = vsub.s32 %v938, %v940
    %v942 = vrot.slane %v928, %v941
    %v943 = vcombine.high %v935, %v935
    %v944 = vcombine.high %v942, %v942
    %v945 = vcombine.high %v825, %v825
    %v947 = vunpack.c.l.s4 1983009808
    %v948 = vunpack.c.0.s8 %v947
    %v949 = vlaneseq
    %v950 = vshrl.u32 %v949, 7
    %v951 = vsub.s32 %v948, %v950
    %v952 = vrot.slane %v825, %v951
    %v954 = vunpack.c.l.s4 1983009808
    %v955 = vunpack.c.0.s8 %v954
    %v956 = vlaneseq
    %v957 = vshrl.u32 %v956, 7
    %v958 = vsub.s32 %v955, %v957
    %v959 = vrot.slane %v945, %v958
    %v960 = vcombine.high %v952, %v952
    %v961 = vcombine.high %v959, %v959
    %v962 = vcombine.high %v826, %v826
    %v964 = vunpack.c.l.s4 1983009808
    %v965 = vunpack.c.0.s8 %v964
    %v966 = vlaneseq
    %v967 = vshrl.u32 %v966, 7
    %v968 = vsub.s32 %v965, %v967
    %v969 = vrot.slane %v826, %v968
    %v971 = vunpack.c.l.s4 1983009808
    %v972 = vunpack.c.0.s8 %v971
    %v973 = vlaneseq
    %v974 = vshrl.u32 %v973, 7
    %v975 = vsub.s32 %v972, %v974
    %v976 = vrot.slane %v962, %v975
    %v977 = vcombine.high %v969, %v969
    %v978 = vcombine.high %v976, %v976
    %v979 = vcombine.high %v827, %v827
    %v981 = vunpack.c.l.s4 1983009808
    %v982 = vunpack.c.0.s8 %v981
    %v983 = vlaneseq
    %v984 = vshrl.u32 %v983, 7
    %v985 = vsub.s32 %v982, %v984
    %v986 = vrot.slane %v827, %v985
    %v988 = vunpack.c.l.s4 1983009808
    %v989 = vunpack.c.0.s8 %v988
    %v990 = vlaneseq
    %v991 = vshrl.u32 %v990, 7
    %v992 = vsub.s32 %v989, %v991
    %v993 = vrot.slane %v979, %v992
    %v994 = vcombine.high %v986, %v986
    %v995 = vcombine.high %v993, %v993
    %v996 = vcombine.high %v828, %v828
    %v998 = vunpack.c.l.s4 1983009808
    %v999 = vunpack.c.0.s8 %v998
    %v1000 = vlaneseq
    %v1001 = vshrl.u32 %v1000, 7
    %v1002 = vsub.s32 %v999, %v1001
    %v1003 = vrot.slane %v828, %v1002
    %v1005 = vunpack.c.l.s4 1983009808
    %v1006 = vunpack.c.0.s8 %v1005
    %v1007 = vlaneseq
    %v1008 = vshrl.u32 %v1007, 7
    %v1009 = vsub.s32 %v1006, %v1008
    %v1010 = vrot.slane %v996, %v1009
    %v1011 = vcombine.high %v1003, %v1003
    %v1012 = vcombine.high %v1010, %v1010
    %v1013 = vcombine.high %v829, %v829
    %v1015 = vunpack.c.l.s4 1983009808
    %v1016 = vunpack.c.0.s8 %v1015
    %v1017 = vlaneseq
    %v1018 = vshrl.u32 %v1017, 7
    %v1019 = vsub.s32 %v1016, %v1018
    %v1020 = vrot.slane %v829, %v1019
    %v1022 = vunpack.c.l.s4 1983009808
    %v1023 = vunpack.c.0.s8 %v1022
    %v1024 = vlaneseq
    %v1025 = vshrl.u32 %v1024, 7
    %v1026 = vsub.s32 %v1023, %v1025
    %v1027 = vrot.slane %v1013, %v1026
    %v1028 = vcombine.high %v1020, %v1020
    %v1029 = vcombine.high %v1027, %v1027
    %v1030 = vcombine.high %v830, %v830
    %v1032 = vunpack.c.l.s4 1983009808
    %v1033 = vunpack.c.0.s8 %v1032
    %v1034 = vlaneseq
    %v1035 = vshrl.u32 %v1034, 7
    %v1036 = vsub.s32 %v1033, %v1035
    %v1037 = vrot.slane %v830, %v1036
    %v1039 = vunpack.c.l.s4 1983009808
    %v1040 = vunpack.c.0.s8 %v1039
    %v1041 = vlaneseq
    %v1042 = vshrl.u32 %v1041, 7
    %v1043 = vsub.s32 %v1040, %v1042
    %v1044 = vrot.slane %v1030, %v1043
    %v1045 = vcombine.high %v1037, %v1037
    %v1046 = vcombine.high %v1044, %v1044
    %v1095 = vrot.slane %v850, 7
    %v1096 = vrot.slane %v1095, 2
    %v1097 = vrot.slane %v858, 7
    %v1098 = vrot.slane %v1097, 2
    %v1099 = vrot.slane %v857, 7
    %v1100 = vrot.slane %v1099, 2
    %v1101 = vrot.slane %v859, 7
    %v1102 = vrot.slane %v1101, 2
    %v1103 = vrot.slane %v867, 7
    %v1104 = vrot.slane %v1103, 2
    %v1105 = vrot.slane %v875, 7
    %v1106 = vrot.slane %v1105, 2
    %v1107 = vrot.slane %v874, 7
    %v1108 = vrot.slane %v1107, 2
    %v1109 = vrot.slane %v876, 7
    %v1110 = vrot.slane %v1109, 2
    %v1111 = vrot.slane %v884, 7
    %v1112 = vrot.slane %v1111, 2
    %v1113 = vrot.slane %v892, 7
    %v1114 = vrot.slane %v1113, 2
    %v1115 = vrot.slane %v891, 7
    %v1116 = vrot.slane %v1115, 2
    %v1117 = vrot.slane %v893, 7
    %v1118 = vrot.slane %v1117, 2
    %v1119 = vrot.slane %v901, 7
    %v1120 = vrot.slane %v1119, 2
    %v1121 = vrot.slane %v909, 7
    %v1122 = vrot.slane %v1121, 2
    %v1123 = vrot.slane %v908, 7
    %v1124 = vrot.slane %v1123, 2
    %v1125 = vrot.slane %v910, 7
    %v1126 = vrot.slane %v1125, 2
    %v1127 = vrot.slane %v918, 7
    %v1128 = vrot.slane %v1127, 2
    %v1129 = vrot.slane %v926, 7
    %v1130 = vrot.slane %v1129, 2
    %v1131 = vrot.slane %v925, 7
    %v1132 = vrot.slane %v1131, 2
    %v1133 = vrot.slane %v927, 7
    %v1134 = vrot.slane %v1133, 2
    %v1135 = vrot.slane %v935, 7
    %v1136 = vrot.slane %v1135, 2
    %v1137 = vrot.slane %v943, 7
    %v1138 = vrot.slane %v1137, 2
    %v1139 = vrot.slane %v942, 7
    %v1140 = vrot.slane %v1139, 2
    %v1141 = vrot.slane %v944, 7
    %v1142 = vrot.slane %v1141, 2
    %v1143 = vrot.slane %v952, 7
    %v1144 = vrot.slane %v1143, 2
    %v1145 = vrot.slane %v960, 7
    %v1146 = vrot.slane %v1145, 2
    %v1147 = vrot.slane %v959, 7
    %v1148 = vrot.slane %v1147, 2
    %v1149 = vrot.slane %v961, 7
    %v1150 = vrot.slane %v1149, 2
    %v1151 = vrot.slane %v969, 7
    %v1152 = vrot.slane %v1151, 2
    %v1153 = vrot.slane %v977, 7
    %v1154 = vrot.slane %v1153, 2
    %v1155 = vrot.slane %v976, 7
    %v1156 = vrot.slane %v1155, 2
    %v1157 = vrot.slane %v978, 7
    %v1158 = vrot.slane %v1157, 2
    %v1159 = vrot.slane %v986, 7
    %v1160 = vrot.slane %v1159, 2
    %v1161 = vrot.slane %v994, 7
    %v1162 = vrot.slane %v1161, 2
    %v1163 = vrot.slane %v993, 7
    %v1164 = vrot.slane %v1163, 2
    %v1165 = vrot.slane %v995, 7
    %v1166 = vrot.slane %v1165, 2
    %v1167 = vrot.slane %v1003, 7
    %v1168 = vrot.slane %v1167, 2
    %v1169 = vrot.slane %v1011, 7
    %v1170 = vrot.slane %v1169, 2
    %v1171 = vrot.slane %v1010, 7
    %v1172 = vrot.slane %v1171, 2
    %v1173 = vrot.slane %v1012, 7
    %v1174 = vrot.slane %v1173, 2
    %v1175 = vrot.slane %v1020, 7
    %v1176 = vrot.slane %v1175, 2
    %v1177 = vrot.slane %v1028, 7
    %v1178 = vrot.slane %v1177, 2
    %v1179 = vrot.slane %v1027, 7
    %v1180 = vrot.slane %v1179, 2
    %v1181 = vrot.slane %v1029, 7
    %v1182 = vrot.slane %v1181, 2
    %v1183 = vrot.slane %v1037, 7
    %v1184 = vrot.slane %v1183, 2
    %v1185 = vrot.slane %v1045, 7
    %v1186 = vrot.slane %v1185, 2
    %v1187 = vrot.slane %v1044, 7
    %v1188 = vrot.slane %v1187, 2
    %v1189 = vrot.slane %v1046, 7
    %v1190 = vrot.slane %v1189, 2
    %v1239 = vmax.f32 %v850, %v1096
    %v1240 = vmax.f32 %v858, %v1098
    %v1241 = vmax.f32 %v857, %v1100
    %v1242 = vmax.f32 %v859, %v1102
    %v1243 = vmax.f32 %v867, %v1104
    %v1244 = vmax.f32 %v875, %v1106
    %v1245 = vmax.f32 %v874, %v1108
    %v1246 = vmax.f32 %v876, %v1110
    %v1247 = vmax.f32 %v884, %v1112
    %v1248 = vmax.f32 %v892, %v1114
    %v1249 = vmax.f32 %v891, %v1116
    %v1250 = vmax.f32 %v893, %v1118
    %v1251 = vmax.f32 %v901, %v1120
    %v1252 = vmax.f32 %v909, %v1122
    %v1253 = vmax.f32 %v908, %v1124
    %v1254 = vmax.f32 %v910, %v1126
    %v1255 = vmax.f32 %v918, %v1128
    %v1256 = vmax.f32 %v926, %v1130
    %v1257 = vmax.f32 %v925, %v1132
    %v1258 = vmax.f32 %v927, %v1134
    %v1259 = vmax.f32 %v935, %v1136
    %v1260 = vmax.f32 %v943, %v1138
    %v1261 = vmax.f32 %v942, %v1140
    %v1262 = vmax.f32 %v944, %v1142
    %v1263 = vmax.f32 %v952, %v1144
    %v1264 = vmax.f32 %v960, %v1146
    %v1265 = vmax.f32 %v959, %v1148
    %v1266 = vmax.f32 %v961, %v1150
    %v1267 = vmax.f32 %v969, %v1152
    %v1268 = vmax.f32 %v977, %v1154
    %v1269 = vmax.f32 %v976, %v1156
    %v1270 = vmax.f32 %v978, %v1158
    %v1271 = vmax.f32 %v986, %v1160
    %v1272 = vmax.f32 %v994, %v1162
    %v1273 = vmax.f32 %v993, %v1164
    %v1274 = vmax.f32 %v995, %v1166
    %v1275 = vmax.f32 %v1003, %v1168
    %v1276 = vmax.f32 %v1011, %v1170
    %v1277 = vmax.f32 %v1010, %v1172
    %v1278 = vmax.f32 %v1012, %v1174
    %v1279 = vmax.f32 %v1020, %v1176
    %v1280 = vmax.f32 %v1028, %v1178
    %v1281 = vmax.f32 %v1027, %v1180
    %v1282 = vmax.f32 %v1029, %v1182
    %v1283 = vmax.f32 %v1037, %v1184
    %v1284 = vmax.f32 %v1045, %v1186
    %v1285 = vmax.f32 %v1044, %v1188
    %v1286 = vmax.f32 %v1046, %v1190
    %v1303 = vlaneseq
    %v1304 = vshrl.u32 %v1303, 7
    %v1305 = vsub.s32 0, %v1304
    %v1306 = vrot.slane %v1239, %v1305
    %v1307 = vlaneseq
    %v1308 = vshrl.u32 %v1307, 7
    %v1309 = vsub.s32 0, %v1308
    %v1310 = vrot.slane %v1240, %v1309
    %v1311 = vlaneseq
    %v1312 = vshrl.u32 %v1311, 7
    %v1313 = vsub.s32 0, %v1312
    %v1314 = vrot.slane %v1245, %v1313
    %v1315 = vlaneseq
    %v1316 = vshrl.u32 %v1315, 7
    %v1317 = vsub.s32 0, %v1316
    %v1318 = vrot.slane %v1246, %v1317
    %v1319 = vlaneseq
    %v1320 = vshrl.u32 %v1319, 7
    %v1321 = vsub.s32 0, %v1320
    %v1322 = vrot.slane %v1251, %v1321
    %v1323 = vlaneseq
    %v1324 = vshrl.u32 %v1323, 7
    %v1325 = vsub.s32 0, %v1324
    %v1326 = vrot.slane %v1252, %v1325
    %v1327 = vlaneseq
    %v1328 = vshrl.u32 %v1327, 7
    %v1329 = vsub.s32 0, %v1328
    %v1330 = vrot.slane %v1257, %v1329
    %v1331 = vlaneseq
    %v1332 = vshrl.u32 %v1331, 7
    %v1333 = vsub.s32 0, %v1332
    %v1334 = vrot.slane %v1258, %v1333
    %v1335 = vlaneseq
    %v1336 = vshrl.u32 %v1335, 7
    %v1337 = vsub.s32 0, %v1336
    %v1338 = vrot.slane %v1263, %v1337
    %v1339 = vlaneseq
    %v1340 = vshrl.u32 %v1339, 7
    %v1341 = vsub.s32 0, %v1340
    %v1342 = vrot.slane %v1264, %v1341
    %v1343 = vlaneseq
    %v1344 = vshrl.u32 %v1343, 7
    %v1345 = vsub.s32 0, %v1344
    %v1346 = vrot.slane %v1269, %v1345
    %v1347 = vlaneseq
    %v1348 = vshrl.u32 %v1347, 7
    %v1349 = vsub.s32 0, %v1348
    %v1350 = vrot.slane %v1270, %v1349
    %v1351 = vlaneseq
    %v1352 = vshrl.u32 %v1351, 7
    %v1353 = vsub.s32 0, %v1352
    %v1354 = vrot.slane %v1275, %v1353
    %v1355 = vlaneseq
    %v1356 = vshrl.u32 %v1355, 7
    %v1357 = vsub.s32 0, %v1356
    %v1358 = vrot.slane %v1276, %v1357
    %v1359 = vlaneseq
    %v1360 = vshrl.u32 %v1359, 7
    %v1361 = vsub.s32 0, %v1360
    %v1362 = vrot.slane %v1281, %v1361
    %v1363 = vlaneseq
    %v1364 = vshrl.u32 %v1363, 7
    %v1365 = vsub.s32 0, %v1364
    %v1366 = vrot.slane %v1282, %v1365
    %vm1367 = vcmask 1041409
    %v1368 = vsel %vm1367, %v1310, %v1306
    %v1369 = vsel %vm1367, %v1318, %v1314
    %v1370 = vsel %vm1367, %v1326, %v1322
    %v1371 = vsel %vm1367, %v1334, %v1330
    %v1372 = vsel %vm1367, %v1342, %v1338
    %v1373 = vsel %vm1367, %v1350, %v1346
    %v1374 = vsel %vm1367, %v1358, %v1354
    %v1375 = vsel %vm1367, %v1366, %v1362
    %v1392 = vlaneseq
    %v1393 = vshrl.u32 %v1392, 7
    %v1394 = vsub.s32 0, %v1393
    %v1395 = vrot.slane %v1241, %v1394
    %v1396 = vlaneseq
    %v1397 = vshrl.u32 %v1396, 7
    %v1398 = vsub.s32 0, %v1397
    %v1399 = vrot.slane %v1247, %v1398
    %v1400 = vlaneseq
    %v1401 = vshrl.u32 %v1400, 7
    %v1402 = vsub.s32 0, %v1401
    %v1403 = vrot.slane %v1253, %v1402
    %v1404 = vlaneseq
    %v1405 = vshrl.u32 %v1404, 7
    %v1406 = vsub.s32 0, %v1405
    %v1407 = vrot.slane %v1259, %v1406
    %v1408 = vlaneseq
    %v1409 = vshrl.u32 %v1408, 7
    %v1410 = vsub.s32 0, %v1409
    %v1411 = vrot.slane %v1265, %v1410
    %v1412 = vlaneseq
    %v1413 = vshrl.u32 %v1412, 7
    %v1414 = vsub.s32 0, %v1413
    %v1415 = vrot.slane %v1271, %v1414
    %v1416 = vlaneseq
    %v1417 = vshrl.u32 %v1416, 7
    %v1418 = vsub.s32 0, %v1417
    %v1419 = vrot.slane %v1277, %v1418
    %v1420 = vlaneseq
    %v1421 = vshrl.u32 %v1420, 7
    %v1422 = vsub.s32 0, %v1421
    %v1423 = vrot.slane %v1283, %v1422
    %v1424 = vsel %vm1367, %v1395, %v1310
    %v1425 = vsel %vm1367, %v1399, %v1318
    %v1426 = vsel %vm1367, %v1403, %v1326
    %v1427 = vsel %vm1367, %v1407, %v1334
    %v1428 = vsel %vm1367, %v1411, %v1342
    %v1429 = vsel %vm1367, %v1415, %v1350
    %v1430 = vsel %vm1367, %v1419, %v1358
    %v1431 = vsel %vm1367, %v1423, %v1366
    %1432 = vrot.lane.b32.xlu0 %v1424, 48
    %v1433 = vpop.permute.xlu0 %1432
    %1434 = vrot.lane.b32.xlu0 %v1425, 48
    %v1435 = vpop.permute.xlu0 %1434
    %1436 = vrot.lane.b32.xlu0 %v1426, 48
    %v1437 = vpop.permute.xlu0 %1436
    %1438 = vrot.lane.b32.xlu0 %v1427, 48
    %v1439 = vpop.permute.xlu0 %1438
    %1440 = vrot.lane.b32.xlu0 %v1428, 48
    %v1441 = vpop.permute.xlu0 %1440
    %1442 = vrot.lane.b32.xlu0 %v1429, 48
    %v1443 = vpop.permute.xlu0 %1442
    %1444 = vrot.lane.b32.xlu0 %v1430, 48
    %v1445 = vpop.permute.xlu0 %1444
    %1446 = vrot.lane.b32.xlu0 %v1431, 48
    %v1447 = vpop.permute.xlu0 %1446
    %v1464 = vlaneseq
    %v1465 = vshrl.u32 %v1464, 7
    %v1466 = vsub.s32 0, %v1465
    %v1467 = vrot.slane %v1242, %v1466
    %v1468 = vlaneseq
    %v1469 = vshrl.u32 %v1468, 7
    %v1470 = vsub.s32 0, %v1469
    %v1471 = vrot.slane %v1248, %v1470
    %v1472 = vlaneseq
    %v1473 = vshrl.u32 %v1472, 7
    %v1474 = vsub.s32 0, %v1473
    %v1475 = vrot.slane %v1254, %v1474
    %v1476 = vlaneseq
    %v1477 = vshrl.u32 %v1476, 7
    %v1478 = vsub.s32 0, %v1477
    %v1479 = vrot.slane %v1260, %v1478
    %v1480 = vlaneseq
    %v1481 = vshrl.u32 %v1480, 7
    %v1482 = vsub.s32 0, %v1481
    %v1483 = vrot.slane %v1266, %v1482
    %v1484 = vlaneseq
    %v1485 = vshrl.u32 %v1484, 7
    %v1486 = vsub.s32 0, %v1485
    %v1487 = vrot.slane %v1272, %v1486
    %v1488 = vlaneseq
    %v1489 = vshrl.u32 %v1488, 7
    %v1490 = vsub.s32 0, %v1489
    %v1491 = vrot.slane %v1278, %v1490
    %v1492 = vlaneseq
    %v1493 = vshrl.u32 %v1492, 7
    %v1494 = vsub.s32 0, %v1493
    %v1495 = vrot.slane %v1284, %v1494
    %v1496 = vsel %vm1367, %v1467, %v1395
    %v1497 = vsel %vm1367, %v1471, %v1399
    %v1498 = vsel %vm1367, %v1475, %v1403
    %v1499 = vsel %vm1367, %v1479, %v1407
    %v1500 = vsel %vm1367, %v1483, %v1411
    %v1501 = vsel %vm1367, %v1487, %v1415
    %v1502 = vsel %vm1367, %v1491, %v1419
    %v1503 = vsel %vm1367, %v1495, %v1423
    %1504 = vrot.lane.b32.xlu0 %v1496, 96
    %v1505 = vpop.permute.xlu0 %1504
    %1506 = vrot.lane.b32.xlu0 %v1497, 96
    %v1507 = vpop.permute.xlu0 %1506
    %1508 = vrot.lane.b32.xlu0 %v1498, 96
    %v1509 = vpop.permute.xlu0 %1508
    %1510 = vrot.lane.b32.xlu0 %v1499, 96
    %v1511 = vpop.permute.xlu0 %1510
    %1512 = vrot.lane.b32.xlu0 %v1500, 96
    %v1513 = vpop.permute.xlu0 %1512
    %1514 = vrot.lane.b32.xlu0 %v1501, 96
    %v1515 = vpop.permute.xlu0 %1514
    %1516 = vrot.lane.b32.xlu0 %v1502, 96
    %v1517 = vpop.permute.xlu0 %1516
    %1518 = vrot.lane.b32.xlu0 %v1503, 96
    %v1519 = vpop.permute.xlu0 %1518
    %v1536 = vlaneseq
    %v1537 = vshrl.u32 %v1536, 7
    %v1538 = vsub.s32 0, %v1537
    %v1539 = vrot.slane %v1243, %v1538
    %v1540 = vlaneseq
    %v1541 = vshrl.u32 %v1540, 7
    %v1542 = vsub.s32 0, %v1541
    %v1543 = vrot.slane %v1249, %v1542
    %v1544 = vlaneseq
    %v1545 = vshrl.u32 %v1544, 7
    %v1546 = vsub.s32 0, %v1545
    %v1547 = vrot.slane %v1255, %v1546
    %v1548 = vlaneseq
    %v1549 = vshrl.u32 %v1548, 7
    %v1550 = vsub.s32 0, %v1549
    %v1551 = vrot.slane %v1261, %v1550
    %v1552 = vlaneseq
    %v1553 = vshrl.u32 %v1552, 7
    %v1554 = vsub.s32 0, %v1553
    %v1555 = vrot.slane %v1267, %v1554
    %v1556 = vlaneseq
    %v1557 = vshrl.u32 %v1556, 7
    %v1558 = vsub.s32 0, %v1557
    %v1559 = vrot.slane %v1273, %v1558
    %v1560 = vlaneseq
    %v1561 = vshrl.u32 %v1560, 7
    %v1562 = vsub.s32 0, %v1561
    %v1563 = vrot.slane %v1279, %v1562
    %v1564 = vlaneseq
    %v1565 = vshrl.u32 %v1564, 7
    %v1566 = vsub.s32 0, %v1565
    %v1567 = vrot.slane %v1285, %v1566
    %v1568 = vsel %vm1367, %v1539, %v1467
    %v1569 = vsel %vm1367, %v1543, %v1471
    %v1570 = vsel %vm1367, %v1547, %v1475
    %v1571 = vsel %vm1367, %v1551, %v1479
    %v1572 = vsel %vm1367, %v1555, %v1483
    %v1573 = vsel %vm1367, %v1559, %v1487
    %v1574 = vsel %vm1367, %v1563, %v1491
    %v1575 = vsel %vm1367, %v1567, %v1495
    %1576 = vrot.lane.b32.xlu0 %v1568, 16
    %v1577 = vpop.permute.xlu0 %1576
    %1578 = vrot.lane.b32.xlu0 %v1569, 16
    %v1579 = vpop.permute.xlu0 %1578
    %1580 = vrot.lane.b32.xlu0 %v1570, 16
    %v1581 = vpop.permute.xlu0 %1580
    %1582 = vrot.lane.b32.xlu0 %v1571, 16
    %v1583 = vpop.permute.xlu0 %1582
    %1584 = vrot.lane.b32.xlu0 %v1572, 16
    %v1585 = vpop.permute.xlu0 %1584
    %1586 = vrot.lane.b32.xlu0 %v1573, 16
    %v1587 = vpop.permute.xlu0 %1586
    %1588 = vrot.lane.b32.xlu0 %v1574, 16
    %v1589 = vpop.permute.xlu0 %1588
    %1590 = vrot.lane.b32.xlu0 %v1575, 16
    %v1591 = vpop.permute.xlu0 %1590
    %v1608 = vlaneseq
    %v1609 = vshrl.u32 %v1608, 7
    %v1610 = vsub.s32 0, %v1609
    %v1611 = vrot.slane %v1244, %v1610
    %v1612 = vlaneseq
    %v1613 = vshrl.u32 %v1612, 7
    %v1614 = vsub.s32 0, %v1613
    %v1615 = vrot.slane %v1250, %v1614
    %v1616 = vlaneseq
    %v1617 = vshrl.u32 %v1616, 7
    %v1618 = vsub.s32 0, %v1617
    %v1619 = vrot.slane %v1256, %v1618
    %v1620 = vlaneseq
    %v1621 = vshrl.u32 %v1620, 7
    %v1622 = vsub.s32 0, %v1621
    %v1623 = vrot.slane %v1262, %v1622
    %v1624 = vlaneseq
    %v1625 = vshrl.u32 %v1624, 7
    %v1626 = vsub.s32 0, %v1625
    %v1627 = vrot.slane %v1268, %v1626
    %v1628 = vlaneseq
    %v1629 = vshrl.u32 %v1628, 7
    %v1630 = vsub.s32 0, %v1629
    %v1631 = vrot.slane %v1274, %v1630
    %v1632 = vlaneseq
    %v1633 = vshrl.u32 %v1632, 7
    %v1634 = vsub.s32 0, %v1633
    %v1635 = vrot.slane %v1280, %v1634
    %v1636 = vlaneseq
    %v1637 = vshrl.u32 %v1636, 7
    %v1638 = vsub.s32 0, %v1637
    %v1639 = vrot.slane %v1286, %v1638
    %v1640 = vsel %vm1367, %v1611, %v1539
    %v1641 = vsel %vm1367, %v1615, %v1543
    %v1642 = vsel %vm1367, %v1619, %v1547
    %v1643 = vsel %vm1367, %v1623, %v1551
    %v1644 = vsel %vm1367, %v1627, %v1555
    %v1645 = vsel %vm1367, %v1631, %v1559
    %v1646 = vsel %vm1367, %v1635, %v1563
    %v1647 = vsel %vm1367, %v1639, %v1567
    %1648 = vrot.lane.b32.xlu0 %v1640, 64
    %v1649 = vpop.permute.xlu0 %1648
    %1650 = vrot.lane.b32.xlu0 %v1641, 64
    %v1651 = vpop.permute.xlu0 %1650
    %1652 = vrot.lane.b32.xlu0 %v1642, 64
    %v1653 = vpop.permute.xlu0 %1652
    %1654 = vrot.lane.b32.xlu0 %v1643, 64
    %v1655 = vpop.permute.xlu0 %1654
    %1656 = vrot.lane.b32.xlu0 %v1644, 64
    %v1657 = vpop.permute.xlu0 %1656
    %1658 = vrot.lane.b32.xlu0 %v1645, 64
    %v1659 = vpop.permute.xlu0 %1658
    %1660 = vrot.lane.b32.xlu0 %v1646, 64
    %v1661 = vpop.permute.xlu0 %1660
    %1662 = vrot.lane.b32.xlu0 %v1647, 64
    %v1663 = vpop.permute.xlu0 %1662
    %v1672 = vsel %vm459, %v1368, %v1433
    %v1673 = vsel %vm459, %v1369, %v1435
    %v1674 = vsel %vm459, %v1370, %v1437
    %v1675 = vsel %vm459, %v1371, %v1439
    %v1676 = vsel %vm459, %v1372, %v1441
    %v1677 = vsel %vm459, %v1373, %v1443
    %v1678 = vsel %vm459, %v1374, %v1445
    %v1679 = vsel %vm459, %v1375, %v1447
    %vm1680 = vcmask 785408
    %v1681 = vsel %vm1680, %v1672, %v1505
    %v1682 = vsel %vm1680, %v1673, %v1507
    %v1683 = vsel %vm1680, %v1674, %v1509
    %v1684 = vsel %vm1680, %v1675, %v1511
    %v1685 = vsel %vm1680, %v1676, %v1513
    %v1686 = vsel %vm1680, %v1677, %v1515
    %v1687 = vsel %vm1680, %v1678, %v1517
    %v1688 = vsel %vm1680, %v1679, %v1519
    %v1689 = vsel %vm425, %v1505, %v1577
    %v1690 = vsel %vm425, %v1507, %v1579
    %v1691 = vsel %vm425, %v1509, %v1581
    %v1692 = vsel %vm425, %v1511, %v1583
    %v1693 = vsel %vm425, %v1513, %v1585
    %v1694 = vsel %vm425, %v1515, %v1587
    %v1695 = vsel %vm425, %v1517, %v1589
    %v1696 = vsel %vm425, %v1519, %v1591
    %v1697 = vsel %vm476, %v1689, %v1649
    %v1698 = vsel %vm476, %v1690, %v1651
    %v1699 = vsel %vm476, %v1691, %v1653
    %v1700 = vsel %vm476, %v1692, %v1655
    %v1701 = vsel %vm476, %v1693, %v1657
    %v1702 = vsel %vm476, %v1694, %v1659
    %v1703 = vsel %vm476, %v1695, %v1661
    %v1704 = vsel %vm476, %v1696, %v1663
    %v1721 = vcombine.low %v1681, %v1697
    %v1723 = vunpack.c.l.s4 1983009808
    %v1724 = vunpack.c.0.s8 %v1723
    %v1725 = vlaneseq
    %v1726 = vshrl.u32 %v1725, 7
    %v1727 = vsub.s32 %v1724, %v1726
    %v1728 = vrot.slane %v1721, %v1727
    %v1729 = vcombine.low %v1682, %v1698
    %v1731 = vunpack.c.l.s4 1983009808
    %v1732 = vunpack.c.0.s8 %v1731
    %v1733 = vlaneseq
    %v1734 = vshrl.u32 %v1733, 7
    %v1735 = vsub.s32 %v1732, %v1734
    %v1736 = vrot.slane %v1729, %v1735
    %v1737 = vcombine.low %v1683, %v1699
    %v1739 = vunpack.c.l.s4 1983009808
    %v1740 = vunpack.c.0.s8 %v1739
    %v1741 = vlaneseq
    %v1742 = vshrl.u32 %v1741, 7
    %v1743 = vsub.s32 %v1740, %v1742
    %v1744 = vrot.slane %v1737, %v1743
    %v1745 = vcombine.low %v1684, %v1700
    %v1747 = vunpack.c.l.s4 1983009808
    %v1748 = vunpack.c.0.s8 %v1747
    %v1749 = vlaneseq
    %v1750 = vshrl.u32 %v1749, 7
    %v1751 = vsub.s32 %v1748, %v1750
    %v1752 = vrot.slane %v1745, %v1751
    %v1753 = vcombine.low %v1685, %v1701
    %v1755 = vunpack.c.l.s4 1983009808
    %v1756 = vunpack.c.0.s8 %v1755
    %v1757 = vlaneseq
    %v1758 = vshrl.u32 %v1757, 7
    %v1759 = vsub.s32 %v1756, %v1758
    %v1760 = vrot.slane %v1753, %v1759
    %v1761 = vcombine.low %v1686, %v1702
    %v1763 = vunpack.c.l.s4 1983009808
    %v1764 = vunpack.c.0.s8 %v1763
    %v1765 = vlaneseq
    %v1766 = vshrl.u32 %v1765, 7
    %v1767 = vsub.s32 %v1764, %v1766
    %v1768 = vrot.slane %v1761, %v1767
    %v1769 = vcombine.low %v1687, %v1703
    %v1771 = vunpack.c.l.s4 1983009808
    %v1772 = vunpack.c.0.s8 %v1771
    %v1773 = vlaneseq
    %v1774 = vshrl.u32 %v1773, 7
    %v1775 = vsub.s32 %v1772, %v1774
    %v1776 = vrot.slane %v1769, %v1775
    %v1777 = vcombine.low %v1688, %v1704
    %v1779 = vunpack.c.l.s4 1983009808
    %v1780 = vunpack.c.0.s8 %v1779
    %v1781 = vlaneseq
    %v1782 = vshrl.u32 %v1781, 7
    %v1783 = vsub.s32 %v1780, %v1782
    %v1784 = vrot.slane %v1777, %v1783
    %v1785 = vld [vmem:[#allocation4] sm:$0xff]
    %v1786 = vld [vmem:[#allocation4 + $0x8] sm:$0xff]
    %v1787 = vld [vmem:[#allocation4 + $0x10] sm:$0xff]
    %v1788 = vld [vmem:[#allocation4 + $0x18] sm:$0xff]
    %v1789 = vld [vmem:[#allocation4 + $0x20] sm:$0xff]
    %v1790 = vld [vmem:[#allocation4 + $0x28] sm:$0xff]
    %v1791 = vld [vmem:[#allocation4 + $0x30] sm:$0xff]
    %v1792 = vld [vmem:[#allocation4 + $0x38] sm:$0xff]
    %v1793 = vld [vmem:[#allocation4 + $0x40] sm:$0xff]
    %v1794 = vld [vmem:[#allocation4 + $0x48] sm:$0xff]
    %v1795 = vld [vmem:[#allocation4 + $0x50] sm:$0xff]
    %v1796 = vld [vmem:[#allocation4 + $0x58] sm:$0xff]
    %v1797 = vld [vmem:[#allocation4 + $0x60] sm:$0xff]
    %v1798 = vld [vmem:[#allocation4 + $0x68] sm:$0xff]
    %v1799 = vld [vmem:[#allocation4 + $0x70] sm:$0xff]
    %v1800 = vld [vmem:[#allocation4 + $0x78] sm:$0xff]
    %v1801 = vld [vmem:[#allocation4 + $0x80] sm:$0xff]
    %v1802 = vld [vmem:[#allocation4 + $0x88] sm:$0xff]
    %v1803 = vld [vmem:[#allocation4 + $0x90] sm:$0xff]
    %v1804 = vld [vmem:[#allocation4 + $0x98] sm:$0xff]
    %v1805 = vld [vmem:[#allocation4 + $0xa0] sm:$0xff]
    %v1806 = vld [vmem:[#allocation4 + $0xa8] sm:$0xff]
    %v1807 = vld [vmem:[#allocation4 + $0xb0] sm:$0xff]
    %v1808 = vld [vmem:[#allocation4 + $0xb8] sm:$0xff]
    %v1809 = vld [vmem:[#allocation4 + $0xc0] sm:$0xff]
    %v1810 = vld [vmem:[#allocation4 + $0xc8] sm:$0xff]
    %v1811 = vld [vmem:[#allocation4 + $0xd0] sm:$0xff]
    %v1812 = vld [vmem:[#allocation4 + $0xd8] sm:$0xff]
    %v1813 = vld [vmem:[#allocation4 + $0xe0] sm:$0xff]
    %v1814 = vld [vmem:[#allocation4 + $0xe8] sm:$0xff]
    %v1815 = vld [vmem:[#allocation4 + $0xf0] sm:$0xff]
    %v1816 = vld [vmem:[#allocation4 + $0xf8] sm:$0xff]
    %v1817 = vld [vmem:[#allocation4 + $0x100] sm:$0xff]
    %v1818 = vld [vmem:[#allocation4 + $0x108] sm:$0xff]
    %v1819 = vld [vmem:[#allocation4 + $0x110] sm:$0xff]
    %v1820 = vld [vmem:[#allocation4 + $0x118] sm:$0xff]
    %v1821 = vld [vmem:[#allocation4 + $0x120] sm:$0xff]
    %v1822 = vld [vmem:[#allocation4 + $0x128] sm:$0xff]
    %v1823 = vld [vmem:[#allocation4 + $0x130] sm:$0xff]
    %v1824 = vld [vmem:[#allocation4 + $0x138] sm:$0xff]
    %v1825 = vld [vmem:[#allocation4 + $0x140] sm:$0xff]
    %v1826 = vld [vmem:[#allocation4 + $0x148] sm:$0xff]
    %v1827 = vld [vmem:[#allocation4 + $0x150] sm:$0xff]
    %v1828 = vld [vmem:[#allocation4 + $0x158] sm:$0xff]
    %v1829 = vld [vmem:[#allocation4 + $0x160] sm:$0xff]
    %v1830 = vld [vmem:[#allocation4 + $0x168] sm:$0xff]
    %v1831 = vld [vmem:[#allocation4 + $0x170] sm:$0xff]
    %v1832 = vld [vmem:[#allocation4 + $0x178] sm:$0xff]
    %v1833 = vld [vmem:[#allocation4 + $0x180] sm:$0xff]
    %v1834 = vld [vmem:[#allocation4 + $0x188] sm:$0xff]
    %v1835 = vld [vmem:[#allocation4 + $0x190] sm:$0xff]
    %v1836 = vld [vmem:[#allocation4 + $0x198] sm:$0xff]
    %v1837 = vld [vmem:[#allocation4 + $0x1a0] sm:$0xff]
    %v1838 = vld [vmem:[#allocation4 + $0x1a8] sm:$0xff]
    %v1839 = vld [vmem:[#allocation4 + $0x1b0] sm:$0xff]
    %v1840 = vld [vmem:[#allocation4 + $0x1b8] sm:$0xff]
    %v1841 = vld [vmem:[#allocation4 + $0x1c0] sm:$0xff]
    %v1842 = vld [vmem:[#allocation4 + $0x1c8] sm:$0xff]
    %v1843 = vld [vmem:[#allocation4 + $0x1d0] sm:$0xff]
    %v1844 = vld [vmem:[#allocation4 + $0x1d8] sm:$0xff]
    %v1845 = vld [vmem:[%s4] sm:$0x3]
    %v1847 = vlaneseq
    %v1848 = vshrl.u32 %v1847, 7
    %v1849 = vsub.s32 0, %v1848
    %v1850 = vrot.slane %v1845, %v1849
    %v1851 = vlaneseq
    %v1852 = vshrl.u32 %v1851, 7
    %v1853 = vsub.s32 1, %v1852
    %v1854 = vrot.slane %v1845, %v1853
    %v1857 = vcombine.low %v1728, %v1736
    %v1858 = vcombine.low %v1744, %v1752
    %v1860 = vunpack.c.l.s4 1983009808
    %v1861 = vunpack.c.0.s8 %v1860
    %v1862 = vlaneseq
    %v1863 = vshrl.u32 %v1862, 7
    %v1864 = vsub.s32 %v1861, %v1863
    %v1865 = vrot.slane %v1857, %v1864
    %v1867 = vunpack.c.l.s4 1983009808
    %v1868 = vunpack.c.0.s8 %v1867
    %v1869 = vlaneseq
    %v1870 = vshrl.u32 %v1869, 7
    %v1871 = vsub.s32 %v1868, %v1870
    %v1872 = vrot.slane %v1858, %v1871
    %v1873 = vcombine.low %v1865, %v1872
    %v1874 = vcombine.high %v1865, %v1872
    %v1875 = vcombine.low %v1760, %v1768
    %v1876 = vcombine.low %v1776, %v1784
    %v1878 = vunpack.c.l.s4 1983009808
    %v1879 = vunpack.c.0.s8 %v1878
    %v1880 = vlaneseq
    %v1881 = vshrl.u32 %v1880, 7
    %v1882 = vsub.s32 %v1879, %v1881
    %v1883 = vrot.slane %v1875, %v1882
    %v1885 = vunpack.c.l.s4 1983009808
    %v1886 = vunpack.c.0.s8 %v1885
    %v1887 = vlaneseq
    %v1888 = vshrl.u32 %v1887, 7
    %v1889 = vsub.s32 %v1886, %v1888
    %v1890 = vrot.slane %v1876, %v1889
    %v1891 = vcombine.low %v1883, %v1890
    %v1892 = vcombine.high %v1883, %v1890
    %vm1895 = vcmask 916480
    %v1896 = vsel %vm1895, %v1874, 0
    %v1898 = vsel %vm1895, %v1892, 0
    %1900 = vmatprep.subr.mxu0 %v1816
    %1901 = vmatpush1.msra.mxu0 %v1815
    %1902 = vmatprep.subr.mxu0 %v1814
    %1903 = vmatpush1.msra.mxu0 %v1813
    %1904 = vmatprep.subr.mxu0 %v1812
    %1905 = vmatpush1.msra.mxu0 %v1811
    %1906 = vmatprep.subr.mxu0 %v1810
    %1907 = vmatpush1.msra.mxu0 %v1809
    %1908 = vmatprep.subr.mxu0 %v1808
    %1909 = vmatpush1.msra.mxu0 %v1807
    %1910 = vmatprep.subr.mxu0 %v1806
    %1911 = vmatpush1.msra.mxu0 %v1805
    %1912 = vmatprep.subr.mxu0 %v1804
    %1913 = vmatpush1.msra.mxu0 %v1803
    %1914 = vmatprep.subr.mxu0 %v1802
    %1915 = vmatpush1.msra.mxu0 %v1801
    %1916 = vmatprep.subr.mxu0 %v1800
    %1917 = vmatpush1.msra.mxu0 %v1799
    %1918 = vmatprep.subr.mxu0 %v1798
    %1919 = vmatpush1.msra.mxu0 %v1797
    %1920 = vmatprep.subr.mxu0 %v1796
    %1921 = vmatpush1.msra.mxu0 %v1795
    %1922 = vmatprep.subr.mxu0 %v1794
    %1923 = vmatpush1.msra.mxu0 %v1793
    %1924 = vmatprep.subr.mxu0 %v1792
    %1925 = vmatpush1.msra.mxu0 %v1791
    %1926 = vmatprep.subr.mxu0 %v1790
    %1927 = vmatpush1.msra.mxu0 %v1789
    %1928 = vmatprep.subr.mxu0 %v1788
    %1929 = vmatpush1.msra.mxu0 %v1787
    %1930 = vmatprep.subr.mxu0 %v1786
    %1931 = vmatpush1.msra.mxu0 %v1785
    %1932 = vmatprep.subr.mxu0 0.0
    %1933 = vmatpush2.msra.mxu0 0.0
    %1934 = vmatprep.subr.mxu0 0.0
    %1935 = vmatpush2.msra.mxu0 0.0
    %1936 = vmatprep.subr.mxu0 %v1844
    %1937 = vmatpush2.msra.mxu0 %v1843
    %1938 = vmatprep.subr.mxu0 %v1842
    %1939 = vmatpush2.msra.mxu0 %v1841
    %1940 = vmatprep.subr.mxu0 %v1840
    %1941 = vmatpush2.msra.mxu0 %v1839
    %1942 = vmatprep.subr.mxu0 %v1838
    %1943 = vmatpush2.msra.mxu0 %v1837
    %1944 = vmatprep.subr.mxu0 %v1836
    %1945 = vmatpush2.msra.mxu0 %v1835
    %1946 = vmatprep.subr.mxu0 %v1834
    %1947 = vmatpush2.msra.mxu0 %v1833
    %1948 = vmatprep.subr.mxu0 %v1832
    %1949 = vmatpush2.msra.mxu0 %v1831
    %1950 = vmatprep.subr.mxu0 %v1830
    %1951 = vmatpush2.msra.mxu0 %v1829
    %1952 = vmatprep.subr.mxu0 %v1828
    %1953 = vmatpush2.msra.mxu0 %v1827
    %1954 = vmatprep.subr.mxu0 %v1826
    %1955 = vmatpush2.msra.mxu0 %v1825
    %1956 = vmatprep.subr.mxu0 %v1824
    %1957 = vmatpush2.msra.mxu0 %v1823
    %1958 = vmatprep.subr.mxu0 %v1822
    %1959 = vmatpush2.msra.mxu0 %v1821
    %1960 = vmatprep.subr.mxu0 %v1820
    %1961 = vmatpush2.msra.mxu0 %v1819
    %1962 = vmatprep.subr.mxu0 %v1818
    %1963 = vmatpush2.msra.mxu0 %v1817
    %1964 = vmatprep.mubr.f32.mxu0 %v1896
    %1965 = vmatmul.mubr.f32.gmra.mxu0 %v1873
    %v1966 = vpop.f32.mrf.mxu0
    %v1967 = vadd.f32 %v1850, %v1966
    %v1968 = vpop.f32.mrf.mxu0
    %v1969 = vadd.f32 %v1854, %v1968
    %1970 = vmatprep.mubr.f32.mxu0 %v1898
    %1971 = vmatmul.mubr.f32.gmra.mxu0 %v1891
    %v1972 = vpop.f32.mrf.mxu0
    %v1973 = vadd.f32 %v1850, %v1972
    %v1974 = vpop.f32.mrf.mxu0
    %v1975 = vadd.f32 %v1854, %v1974
    %1976 = vdwg.mxu0
    %v1977 = vmul.f32 %v1967, 0.5
    %v1978 = vmul.f32 %v1969, 0.5
    %v1979 = vmul.f32 %v1973, 0.5
    %v1980 = vmul.f32 %v1975, 0.5
    %v1981 = vtanh.pop %v1977
    %v1982 = vtanh.pop %v1978
    %v1983 = vtanh.pop %v1979
    %v1984 = vtanh.pop %v1980
    %v1985 = vmul.f32 %v1981, 0.5
    %v1986 = vmul.f32 %v1982, 0.5
    %v1987 = vmul.f32 %v1983, 0.5
    %v1988 = vmul.f32 %v1984, 0.5
    %v1989 = vadd.f32 %v1985, 0.5
    %v1990 = vadd.f32 %v1986, 0.5
    %v1991 = vadd.f32 %v1987, 0.5
    %v1992 = vadd.f32 %v1988, 0.5
    %v1993 = vmax.f32 %v1989, %v1990
    %v1994 = vmax.f32 %v1991, %v1992
    %v1997 = vcombine.high %v1993, %v1993
    %v1999 = vunpack.c.l.s4 1983009808
    %v2000 = vunpack.c.0.s8 %v1999
    %v2001 = vlaneseq
    %v2002 = vshrl.u32 %v2001, 7
    %v2003 = vsub.s32 %v2000, %v2002
    %v2004 = vrot.slane %v1993, %v2003
    %v2006 = vunpack.c.l.s4 1983009808
    %v2007 = vunpack.c.0.s8 %v2006
    %v2008 = vlaneseq
    %v2009 = vshrl.u32 %v2008, 7
    %v2010 = vsub.s32 %v2007, %v2009
    %v2011 = vrot.slane %v1997, %v2010
    %v2012 = vcombine.high %v2004, %v2004
    %v2013 = vcombine.high %v2011, %v2011
    %v2014 = vcombine.high %v1994, %v1994
    %v2016 = vunpack.c.l.s4 1983009808
    %v2017 = vunpack.c.0.s8 %v2016
    %v2018 = vlaneseq
    %v2019 = vshrl.u32 %v2018, 7
    %v2020 = vsub.s32 %v2017, %v2019
    %v2021 = vrot.slane %v1994, %v2020
    %v2023 = vunpack.c.l.s4 1983009808
    %v2024 = vunpack.c.0.s8 %v2023
    %v2025 = vlaneseq
    %v2026 = vshrl.u32 %v2025, 7
    %v2027 = vsub.s32 %v2024, %v2026
    %v2028 = vrot.slane %v2014, %v2027
    %v2029 = vcombine.high %v2021, %v2021
    %v2030 = vcombine.high %v2028, %v2028
    %v2039 = vrot.slane %v2004, 7
    %v2040 = vrot.slane %v2039, 2
    %v2041 = vrot.slane %v2012, 7
    %v2042 = vrot.slane %v2041, 2
    %v2043 = vrot.slane %v2011, 7
    %v2044 = vrot.slane %v2043, 2
    %v2045 = vrot.slane %v2013, 7
    %v2046 = vrot.slane %v2045, 2
    %v2047 = vrot.slane %v2021, 7
    %v2048 = vrot.slane %v2047, 2
    %v2049 = vrot.slane %v2029, 7
    %v2050 = vrot.slane %v2049, 2
    %v2051 = vrot.slane %v2028, 7
    %v2052 = vrot.slane %v2051, 2
    %v2053 = vrot.slane %v2030, 7
    %v2054 = vrot.slane %v2053, 2
    %v2063 = vmax.f32 %v2004, %v2040
    %v2064 = vmax.f32 %v2012, %v2042
    %v2065 = vmax.f32 %v2011, %v2044
    %v2066 = vmax.f32 %v2013, %v2046
    %v2067 = vmax.f32 %v2021, %v2048
    %v2068 = vmax.f32 %v2029, %v2050
    %v2069 = vmax.f32 %v2028, %v2052
    %v2070 = vmax.f32 %v2030, %v2054
    %v2071 = vld [vmem:[#allocation6] sm:$0xff]
    %v2072 = vld [vmem:[#allocation6 + $0x8] sm:$0xff]
    %v2073 = vld [vmem:[#allocation6 + $0x10] sm:$0xff]
    %v2074 = vld [vmem:[#allocation6 + $0x18] sm:$0xff]
    %v2075 = vld [vmem:[#allocation6 + $0x20] sm:$0xff]
    %v2076 = vld [vmem:[#allocation6 + $0x28] sm:$0xff]
    %v2077 = vld [vmem:[#allocation6 + $0x30] sm:$0xff]
    %v2078 = vld [vmem:[#allocation6 + $0x38] sm:$0xff]
    %v2079 = vld [vmem:[#allocation6 + $0x40] sm:$0xff]
    %v2080 = vld [vmem:[#allocation6 + $0x48] sm:$0xff]
    %v2081 = vld [vmem:[#allocation6 + $0x50] sm:$0xff]
    %v2082 = vld [vmem:[#allocation6 + $0x58] sm:$0xff]
    %v2083 = vld [vmem:[#allocation6 + $0x60] sm:$0xff]
    %v2084 = vld [vmem:[#allocation6 + $0x68] sm:$0xff]
    %v2085 = vld [vmem:[#allocation6 + $0x70] sm:$0xff]
    %v2086 = vld [vmem:[#allocation6 + $0x78] sm:$0xff]
    %v2087 = vld [vmem:[#allocation6 + $0x80] sm:$0xff]
    %v2088 = vld [vmem:[#allocation6 + $0x88] sm:$0xff]
    %v2089 = vld [vmem:[#allocation6 + $0x90] sm:$0xff]
    %v2090 = vld [vmem:[#allocation6 + $0x98] sm:$0xff]
    %v2091 = vld [vmem:[#allocation6 + $0xa0] sm:$0xff]
    %v2092 = vld [vmem:[#allocation6 + $0xa8] sm:$0xff]
    %v2093 = vld [vmem:[#allocation6 + $0xb0] sm:$0xff]
    %v2094 = vld [vmem:[#allocation6 + $0xb8] sm:$0xff]
    %v2095 = vld [vmem:[%s6] sm:$0xf]
    %v2097 = vlaneseq
    %v2098 = vshrl.u32 %v2097, 7
    %v2099 = vsub.s32 0, %v2098
    %v2100 = vrot.slane %v2095, %v2099
    %v2101 = vlaneseq
    %v2102 = vshrl.u32 %v2101, 7
    %v2103 = vsub.s32 1, %v2102
    %v2104 = vrot.slane %v2095, %v2103
    %v2105 = vlaneseq
    %v2106 = vshrl.u32 %v2105, 7
    %v2107 = vsub.s32 2, %v2106
    %v2108 = vrot.slane %v2095, %v2107
    %v2109 = vlaneseq
    %v2110 = vshrl.u32 %v2109, 7
    %v2111 = vsub.s32 3, %v2110
    %v2112 = vrot.slane %v2095, %v2111
    %v2125 = vlaneseq
    %v2126 = vshrl.u32 %v2125, 7
    %v2127 = vsub.s32 0, %v2126
    %v2128 = vrot.slane %v2063, %v2127
    %v2129 = vlaneseq
    %v2130 = vshrl.u32 %v2129, 7
    %v2131 = vsub.s32 0, %v2130
    %v2132 = vrot.slane %v2064, %v2131
    %v2133 = vlaneseq
    %v2134 = vshrl.u32 %v2133, 7
    %v2135 = vsub.s32 0, %v2134
    %v2136 = vrot.slane %v2065, %v2135
    %v2137 = vlaneseq
    %v2138 = vshrl.u32 %v2137, 7
    %v2139 = vsub.s32 0, %v2138
    %v2140 = vrot.slane %v2066, %v2139
    %v2141 = vlaneseq
    %v2142 = vshrl.u32 %v2141, 7
    %v2143 = vsub.s32 0, %v2142
    %v2144 = vrot.slane %v2067, %v2143
    %v2145 = vlaneseq
    %v2146 = vshrl.u32 %v2145, 7
    %v2147 = vsub.s32 0, %v2146
    %v2148 = vrot.slane %v2068, %v2147
    %v2149 = vlaneseq
    %v2150 = vshrl.u32 %v2149, 7
    %v2151 = vsub.s32 0, %v2150
    %v2152 = vrot.slane %v2069, %v2151
    %v2153 = vlaneseq
    %v2154 = vshrl.u32 %v2153, 7
    %v2155 = vsub.s32 0, %v2154
    %v2156 = vrot.slane %v2070, %v2155
    %v2157 = vsel %vm1367, %v2132, %v2128
    %vm2158 = vcmask 1042434
    %v2159 = vsel %vm2158, %v2136, %v2157
    %vm2160 = vcmask 1043459
    %v2161 = vsel %vm2160, %v2140, %v2159
    %vm2162 = vcmask 1044484
    %v2163 = vsel %vm2162, %v2144, %v2161
    %vm2164 = vcmask 1045509
    %v2165 = vsel %vm2164, %v2148, %v2163
    %vm2166 = vcmask 1046534
    %v2167 = vsel %vm2166, %v2152, %v2165
    %vm2168 = vcmask 1047559
    %v2169 = vsel %vm2168, %v2156, %v2167
    %v2170 = vsel %vm459, %v2169, 0
    %2172 = vmatprep.subr.mxu0 0.0
    %2173 = vmatpush1.msra.mxu0 0.0
    %2174 = vmatprep.subr.mxu0 0.0
    %2175 = vmatpush1.msra.mxu0 0.0
    %2176 = vmatprep.subr.mxu0 0.0
    %2177 = vmatpush1.msra.mxu0 0.0
    %2178 = vmatprep.subr.mxu0 0.0
    %2179 = vmatpush1.msra.mxu0 0.0
    %2180 = vmatprep.subr.mxu0 0.0
    %2181 = vmatpush1.msra.mxu0 0.0
    %2182 = vmatprep.subr.mxu0 0.0
    %2183 = vmatpush1.msra.mxu0 0.0
    %2184 = vmatprep.subr.mxu0 0.0
    %2185 = vmatpush1.msra.mxu0 0.0
    %2186 = vmatprep.subr.mxu0 0.0
    %2187 = vmatpush1.msra.mxu0 0.0
    %2188 = vmatprep.subr.mxu0 0.0
    %2189 = vmatpush1.msra.mxu0 0.0
    %2190 = vmatprep.subr.mxu0 0.0
    %2191 = vmatpush1.msra.mxu0 0.0
    %2192 = vmatprep.subr.mxu0 %v2092
    %2193 = vmatpush1.msra.mxu0 %v2091
    %2194 = vmatprep.subr.mxu0 %v2088
    %2195 = vmatpush1.msra.mxu0 %v2087
    %2196 = vmatprep.subr.mxu0 %v2084
    %2197 = vmatpush1.msra.mxu0 %v2083
    %2198 = vmatprep.subr.mxu0 %v2080
    %2199 = vmatpush1.msra.mxu0 %v2079
    %2200 = vmatprep.subr.mxu0 %v2076
    %2201 = vmatpush1.msra.mxu0 %v2075
    %2202 = vmatprep.subr.mxu0 %v2072
    %2203 = vmatpush1.msra.mxu0 %v2071
    %2204 = vmatprep.subr.mxu0 0.0
    %2205 = vmatpush2.msra.mxu0 0.0
    %2206 = vmatprep.subr.mxu0 0.0
    %2207 = vmatpush2.msra.mxu0 0.0
    %2208 = vmatprep.subr.mxu0 0.0
    %2209 = vmatpush2.msra.mxu0 0.0
    %2210 = vmatprep.subr.mxu0 0.0
    %2211 = vmatpush2.msra.mxu0 0.0
    %2212 = vmatprep.subr.mxu0 0.0
    %2213 = vmatpush2.msra.mxu0 0.0
    %2214 = vmatprep.subr.mxu0 0.0
    %2215 = vmatpush2.msra.mxu0 0.0
    %2216 = vmatprep.subr.mxu0 0.0
    %2217 = vmatpush2.msra.mxu0 0.0
    %2218 = vmatprep.subr.mxu0 0.0
    %2219 = vmatpush2.msra.mxu0 0.0
    %2220 = vmatprep.subr.mxu0 0.0
    %2221 = vmatpush2.msra.mxu0 0.0
    %2222 = vmatprep.subr.mxu0 0.0
    %2223 = vmatpush2.msra.mxu0 0.0
    %2224 = vmatprep.subr.mxu0 0.0
    %2225 = vmatpush2.msra.mxu0 0.0
    %2226 = vmatprep.subr.mxu0 0.0
    %2227 = vmatpush2.msra.mxu0 0.0
    %2228 = vmatprep.subr.mxu0 0.0
    %2229 = vmatpush2.msra.mxu0 0.0
    %2230 = vmatprep.subr.mxu0 0.0
    %2231 = vmatpush2.msra.mxu0 0.0
    %2232 = vmatprep.subr.mxu0 0.0
    %2233 = vmatpush2.msra.mxu0 0.0
    %2234 = vmatprep.subr.mxu0 0.0
    %2235 = vmatpush2.msra.mxu0 0.0
    %2236 = vmatprep.mubr.f32.mxu0 0.0
    %2237 = vmatmul.mubr.f32.gmra.mxu0 %v2170
    %v2238 = vpop.f32.mrf.mxu0
    %v2239 = vadd.f32 %v2100, %v2238
    %v2240 = vpop.f32.mrf.mxu0
    %v2241 = vadd.f32 %v2104, %v2240
    %2242 = vdwg.mxu0
    %2243 = vmatprep.subr.mxu0 0.0
    %2244 = vmatpush1.msra.mxu0 0.0
    %2245 = vmatprep.subr.mxu0 0.0
    %2246 = vmatpush1.msra.mxu0 0.0
    %2247 = vmatprep.subr.mxu0 0.0
    %2248 = vmatpush1.msra.mxu0 0.0
    %2249 = vmatprep.subr.mxu0 0.0
    %2250 = vmatpush1.msra.mxu0 0.0
    %2251 = vmatprep.subr.mxu0 0.0
    %2252 = vmatpush1.msra.mxu0 0.0
    %2253 = vmatprep.subr.mxu0 0.0
    %2254 = vmatpush1.msra.mxu0 0.0
    %2255 = vmatprep.subr.mxu0 0.0
    %2256 = vmatpush1.msra.mxu0 0.0
    %2257 = vmatprep.subr.mxu0 0.0
    %2258 = vmatpush1.msra.mxu0 0.0
    %2259 = vmatprep.subr.mxu0 0.0
    %2260 = vmatpush1.msra.mxu0 0.0
    %2261 = vmatprep.subr.mxu0 0.0
    %2262 = vmatpush1.msra.mxu0 0.0
    %2263 = vmatprep.subr.mxu0 %v2094
    %2264 = vmatpush1.msra.mxu0 %v2093
    %2265 = vmatprep.subr.mxu0 %v2090
    %2266 = vmatpush1.msra.mxu0 %v2089
    %2267 = vmatprep.subr.mxu0 %v2086
    %2268 = vmatpush1.msra.mxu0 %v2085
    %2269 = vmatprep.subr.mxu0 %v2082
    %2270 = vmatpush1.msra.mxu0 %v2081
    %2271 = vmatprep.subr.mxu0 %v2078
    %2272 = vmatpush1.msra.mxu0 %v2077
    %2273 = vmatprep.subr.mxu0 %v2074
    %2274 = vmatpush1.msra.mxu0 %v2073
    %2275 = vmatprep.subr.mxu0 0.0
    %2276 = vmatpush2.msra.mxu0 0.0
    %2277 = vmatprep.subr.mxu0 0.0
    %2278 = vmatpush2.msra.mxu0 0.0
    %2279 = vmatprep.subr.mxu0 0.0
    %2280 = vmatpush2.msra.mxu0 0.0
    %2281 = vmatprep.subr.mxu0 0.0
    %2282 = vmatpush2.msra.mxu0 0.0
    %2283 = vmatprep.subr.mxu0 0.0
    %2284 = vmatpush2.msra.mxu0 0.0
    %2285 = vmatprep.subr.mxu0 0.0
    %2286 = vmatpush2.msra.mxu0 0.0
    %2287 = vmatprep.subr.mxu0 0.0
    %2288 = vmatpush2.msra.mxu0 0.0
    %2289 = vmatprep.subr.mxu0 0.0
    %2290 = vmatpush2.msra.mxu0 0.0
    %2291 = vmatprep.subr.mxu0 0.0
    %2292 = vmatpush2.msra.mxu0 0.0
    %2293 = vmatprep.subr.mxu0 0.0
    %2294 = vmatpush2.msra.mxu0 0.0
    %2295 = vmatprep.subr.mxu0 0.0
    %2296 = vmatpush2.msra.mxu0 0.0
    %2297 = vmatprep.subr.mxu0 0.0
    %2298 = vmatpush2.msra.mxu0 0.0
    %2299 = vmatprep.subr.mxu0 0.0
    %2300 = vmatpush2.msra.mxu0 0.0
    %2301 = vmatprep.subr.mxu0 0.0
    %2302 = vmatpush2.msra.mxu0 0.0
    %2303 = vmatprep.subr.mxu0 0.0
    %2304 = vmatpush2.msra.mxu0 0.0
    %2305 = vmatprep.subr.mxu0 0.0
    %2306 = vmatpush2.msra.mxu0 0.0
    %2307 = vmatprep.mubr.f32.mxu0 0.0
    %2308 = vmatmul.mubr.f32.gmra.mxu0 %v2170
    %v2309 = vpop.f32.mrf.mxu0
    %v2310 = vadd.f32 %v2108, %v2309
    %v2311 = vpop.f32.mrf.mxu0
    %v2312 = vadd.f32 %v2112, %v2311
    %2313 = vdwg.mxu0
    %v2314 = vld [vmem:[#allocation7] sm:$0xff]
    %v2315 = vld [vmem:[#allocation7 + $0x8] sm:$0xff]
    %v2316 = vld [vmem:[#allocation7 + $0x10] sm:$0xff]
    %v2317 = vld [vmem:[#allocation7 + $0x18] sm:$0xff]
    %v2319 = vsel %vm442, 0.0, 0
    %2321 = vmatprep.subr.mxu0 0.0
    %2322 = vmatpush1.msra.mxu0 0.0
    %2323 = vmatprep.subr.mxu0 0.0
    %2324 = vmatpush1.msra.mxu0 0.0
    %2325 = vmatprep.subr.mxu0 0.0
    %2326 = vmatpush1.msra.mxu0 0.0
    %2327 = vmatprep.subr.mxu0 0.0
    %2328 = vmatpush1.msra.mxu0 0.0
    %2329 = vmatprep.subr.mxu0 0.0
    %2330 = vmatpush1.msra.mxu0 0.0
    %2331 = vmatprep.subr.mxu0 0.0
    %2332 = vmatpush1.msra.mxu0 0.0
    %2333 = vmatprep.subr.mxu0 0.0
    %2334 = vmatpush1.msra.mxu0 0.0
    %2335 = vmatprep.subr.mxu0 0.0
    %2336 = vmatpush1.msra.mxu0 0.0
    %2337 = vmatprep.subr.mxu0 0.0
    %2338 = vmatpush1.msra.mxu0 0.0
    %2339 = vmatprep.subr.mxu0 0.0
    %2340 = vmatpush1.msra.mxu0 0.0
    %2341 = vmatprep.subr.mxu0 0.0
    %2342 = vmatpush1.msra.mxu0 0.0
    %2343 = vmatprep.subr.mxu0 0.0
    %2344 = vmatpush1.msra.mxu0 0.0
    %2345 = vmatprep.subr.mxu0 0.0
    %2346 = vmatpush1.msra.mxu0 %v2317
    %2347 = vmatprep.subr.mxu0 0.0
    %2348 = vmatpush1.msra.mxu0 %v2316
    %2349 = vmatprep.subr.mxu0 0.0
    %2350 = vmatpush1.msra.mxu0 %v2315
    %2351 = vmatprep.subr.mxu0 0.0
    %2352 = vmatpush1.msra.mxu0 %v2314
    %2353 = vmatprep.subr.mxu0 0.0
    %2354 = vmatpush2.msra.mxu0 0.0
    %2355 = vmatprep.subr.mxu0 0.0
    %2356 = vmatpush2.msra.mxu0 0.0
    %2357 = vmatprep.subr.mxu0 0.0
    %2358 = vmatpush2.msra.mxu0 0.0
    %2359 = vmatprep.subr.mxu0 0.0
    %2360 = vmatpush2.msra.mxu0 0.0
    %2361 = vmatprep.subr.mxu0 0.0
    %2362 = vmatpush2.msra.mxu0 0.0
    %2363 = vmatprep.subr.mxu0 0.0
    %2364 = vmatpush2.msra.mxu0 0.0
    %2365 = vmatprep.subr.mxu0 0.0
    %2366 = vmatpush2.msra.mxu0 0.0
    %2367 = vmatprep.subr.mxu0 0.0
    %2368 = vmatpush2.msra.mxu0 0.0
    %2369 = vmatprep.subr.mxu0 0.0
    %2370 = vmatpush2.msra.mxu0 0.0
    %2371 = vmatprep.subr.mxu0 0.0
    %2372 = vmatpush2.msra.mxu0 0.0
    %2373 = vmatprep.subr.mxu0 0.0
    %2374 = vmatpush2.msra.mxu0 0.0
    %2375 = vmatprep.subr.mxu0 0.0
    %2376 = vmatpush2.msra.mxu0 0.0
    %2377 = vmatprep.subr.mxu0 0.0
    %2378 = vmatpush2.msra.mxu0 0.0
    %2379 = vmatprep.subr.mxu0 0.0
    %2380 = vmatpush2.msra.mxu0 0.0
    %2381 = vmatprep.subr.mxu0 0.0
    %2382 = vmatpush2.msra.mxu0 0.0
    %2383 = vmatprep.subr.mxu0 0.0
    %2384 = vmatpush2.msra.mxu0 0.0
    %2385 = vmatprep.mubr.f32.mxu0 0.0
    %2386 = vmatmul.mubr.f32.gmra.mxu0 %v2319
    %v2387 = vpop.f32.mrf.mxu0
    %v2388 = vadd.f32 0.0, %v2387
    %v2389 = vpop.f32.mrf.mxu0
    %2390 = vdwg.mxu0
    %v2391 = vadd.f32 %v2239, %v2388
    %v2392 = vtanh.pop %v2391
    %v2394 = vsel %vm442, %v2392, 0
    %2396 = vmatprep.subr.mxu0 0.0
    %2397 = vmatpush1.msra.mxu0 0.0
    %2398 = vmatprep.subr.mxu0 0.0
    %2399 = vmatpush1.msra.mxu0 0.0
    %2400 = vmatprep.subr.mxu0 0.0
    %2401 = vmatpush1.msra.mxu0 0.0
    %2402 = vmatprep.subr.mxu0 0.0
    %2403 = vmatpush1.msra.mxu0 0.0
    %2404 = vmatprep.subr.mxu0 0.0
    %2405 = vmatpush1.msra.mxu0 0.0
    %2406 = vmatprep.subr.mxu0 0.0
    %2407 = vmatpush1.msra.mxu0 0.0
    %2408 = vmatprep.subr.mxu0 0.0
    %2409 = vmatpush1.msra.mxu0 0.0
    %2410 = vmatprep.subr.mxu0 0.0
    %2411 = vmatpush1.msra.mxu0 0.0
    %2412 = vmatprep.subr.mxu0 0.0
    %2413 = vmatpush1.msra.mxu0 0.0
    %2414 = vmatprep.subr.mxu0 0.0
    %2415 = vmatpush1.msra.mxu0 0.0
    %2416 = vmatprep.subr.mxu0 0.0
    %2417 = vmatpush1.msra.mxu0 0.0
    %2418 = vmatprep.subr.mxu0 0.0
    %2419 = vmatpush1.msra.mxu0 0.0
    %2420 = vmatprep.subr.mxu0 0.0
    %2421 = vmatpush1.msra.mxu0 %v2317
    %2422 = vmatprep.subr.mxu0 0.0
    %2423 = vmatpush1.msra.mxu0 %v2316
    %2424 = vmatprep.subr.mxu0 0.0
    %2425 = vmatpush1.msra.mxu0 %v2315
    %2426 = vmatprep.subr.mxu0 0.0
    %2427 = vmatpush1.msra.mxu0 %v2314
    %2428 = vmatprep.subr.mxu0 0.0
    %2429 = vmatpush2.msra.mxu0 0.0
    %2430 = vmatprep.subr.mxu0 0.0
    %2431 = vmatpush2.msra.mxu0 0.0
    %2432 = vmatprep.subr.mxu0 0.0
    %2433 = vmatpush2.msra.mxu0 0.0
    %2434 = vmatprep.subr.mxu0 0.0
    %2435 = vmatpush2.msra.mxu0 0.0
    %2436 = vmatprep.subr.mxu0 0.0
    %2437 = vmatpush2.msra.mxu0 0.0
    %2438 = vmatprep.subr.mxu0 0.0
    %2439 = vmatpush2.msra.mxu0 0.0
    %2440 = vmatprep.subr.mxu0 0.0
    %2441 = vmatpush2.msra.mxu0 0.0
    %2442 = vmatprep.subr.mxu0 0.0
    %2443 = vmatpush2.msra.mxu0 0.0
    %2444 = vmatprep.subr.mxu0 0.0
    %2445 = vmatpush2.msra.mxu0 0.0
    %2446 = vmatprep.subr.mxu0 0.0
    %2447 = vmatpush2.msra.mxu0 0.0
    %2448 = vmatprep.subr.mxu0 0.0
    %2449 = vmatpush2.msra.mxu0 0.0
    %2450 = vmatprep.subr.mxu0 0.0
    %2451 = vmatpush2.msra.mxu0 0.0
    %2452 = vmatprep.subr.mxu0 0.0
    %2453 = vmatpush2.msra.mxu0 0.0
    %2454 = vmatprep.subr.mxu0 0.0
    %2455 = vmatpush2.msra.mxu0 0.0
    %2456 = vmatprep.subr.mxu0 0.0
    %2457 = vmatpush2.msra.mxu0 0.0
    %2458 = vmatprep.subr.mxu0 0.0
    %2459 = vmatpush2.msra.mxu0 0.0
    %2460 = vmatprep.mubr.f32.mxu0 0.0
    %2461 = vmatmul.mubr.f32.gmra.mxu0 %v2394
    %v2462 = vpop.f32.mrf.mxu0
    %v2463 = vadd.f32 0.0, %v2462
    %v2464 = vpop.f32.mrf.mxu0
    %2465 = vdwg.mxu0
    %v2466 = vadd.f32 %v2241, %v2463
    %v2467 = vtanh.pop %v2466
    %v2469 = vsel %vm442, %v2467, 0
    %2471 = vmatprep.subr.mxu0 0.0
    %2472 = vmatpush1.msra.mxu0 0.0
    %2473 = vmatprep.subr.mxu0 0.0
    %2474 = vmatpush1.msra.mxu0 0.0
    %2475 = vmatprep.subr.mxu0 0.0
    %2476 = vmatpush1.msra.mxu0 0.0
    %2477 = vmatprep.subr.mxu0 0.0
    %2478 = vmatpush1.msra.mxu0 0.0
    %2479 = vmatprep.subr.mxu0 0.0
    %2480 = vmatpush1.msra.mxu0 0.0
    %2481 = vmatprep.subr.mxu0 0.0
    %2482 = vmatpush1.msra.mxu0 0.0
    %2483 = vmatprep.subr.mxu0 0.0
    %2484 = vmatpush1.msra.mxu0 0.0
    %2485 = vmatprep.subr.mxu0 0.0
    %2486 = vmatpush1.msra.mxu0 0.0
    %2487 = vmatprep.subr.mxu0 0.0
    %2488 = vmatpush1.msra.mxu0 0.0
    %2489 = vmatprep.subr.mxu0 0.0
    %2490 = vmatpush1.msra.mxu0 0.0
    %2491 = vmatprep.subr.mxu0 0.0
    %2492 = vmatpush1.msra.mxu0 0.0
    %2493 = vmatprep.subr.mxu0 0.0
    %2494 = vmatpush1.msra.mxu0 0.0
    %2495 = vmatprep.subr.mxu0 0.0
    %2496 = vmatpush1.msra.mxu0 %v2317
    %2497 = vmatprep.subr.mxu0 0.0
    %2498 = vmatpush1.msra.mxu0 %v2316
    %2499 = vmatprep.subr.mxu0 0.0
    %2500 = vmatpush1.msra.mxu0 %v2315
    %2501 = vmatprep.subr.mxu0 0.0
    %2502 = vmatpush1.msra.mxu0 %v2314
    %2503 = vmatprep.subr.mxu0 0.0
    %2504 = vmatpush2.msra.mxu0 0.0
    %2505 = vmatprep.subr.mxu0 0.0
    %2506 = vmatpush2.msra.mxu0 0.0
    %2507 = vmatprep.subr.mxu0 0.0
    %2508 = vmatpush2.msra.mxu0 0.0
    %2509 = vmatprep.subr.mxu0 0.0
    %2510 = vmatpush2.msra.mxu0 0.0
    %2511 = vmatprep.subr.mxu0 0.0
    %2512 = vmatpush2.msra.mxu0 0.0
    %2513 = vmatprep.subr.mxu0 0.0
    %2514 = vmatpush2.msra.mxu0 0.0
    %2515 = vmatprep.subr.mxu0 0.0
    %2516 = vmatpush2.msra.mxu0 0.0
    %2517 = vmatprep.subr.mxu0 0.0
    %2518 = vmatpush2.msra.mxu0 0.0
    %2519 = vmatprep.subr.mxu0 0.0
    %2520 = vmatpush2.msra.mxu0 0.0
    %2521 = vmatprep.subr.mxu0 0.0
    %2522 = vmatpush2.msra.mxu0 0.0
    %2523 = vmatprep.subr.mxu0 0.0
    %2524 = vmatpush2.msra.mxu0 0.0
    %2525 = vmatprep.subr.mxu0 0.0
    %2526 = vmatpush2.msra.mxu0 0.0
    %2527 = vmatprep.subr.mxu0 0.0
    %2528 = vmatpush2.msra.mxu0 0.0
    %2529 = vmatprep.subr.mxu0 0.0
    %2530 = vmatpush2.msra.mxu0 0.0
    %2531 = vmatprep.subr.mxu0 0.0
    %2532 = vmatpush2.msra.mxu0 0.0
    %2533 = vmatprep.subr.mxu0 0.0
    %2534 = vmatpush2.msra.mxu0 0.0
    %2535 = vmatprep.mubr.f32.mxu0 0.0
    %2536 = vmatmul.mubr.f32.gmra.mxu0 %v2469
    %v2537 = vpop.f32.mrf.mxu0
    %v2538 = vadd.f32 0.0, %v2537
    %v2539 = vpop.f32.mrf.mxu0
    %2540 = vdwg.mxu0
    %v2541 = vadd.f32 %v2310, %v2538
    %v2542 = vtanh.pop %v2541
    %v2544 = vsel %vm442, %v2542, 0
    %2546 = vmatprep.subr.mxu0 0.0
    %2547 = vmatpush1.msra.mxu0 0.0
    %2548 = vmatprep.subr.mxu0 0.0
    %2549 = vmatpush1.msra.mxu0 0.0
    %2550 = vmatprep.subr.mxu0 0.0
    %2551 = vmatpush1.msra.mxu0 0.0
    %2552 = vmatprep.subr.mxu0 0.0
    %2553 = vmatpush1.msra.mxu0 0.0
    %2554 = vmatprep.subr.mxu0 0.0
    %2555 = vmatpush1.msra.mxu0 0.0
    %2556 = vmatprep.subr.mxu0 0.0
    %2557 = vmatpush1.msra.mxu0 0.0
    %2558 = vmatprep.subr.mxu0 0.0
    %2559 = vmatpush1.msra.mxu0 0.0
    %2560 = vmatprep.subr.mxu0 0.0
    %2561 = vmatpush1.msra.mxu0 0.0
    %2562 = vmatprep.subr.mxu0 0.0
    %2563 = vmatpush1.msra.mxu0 0.0
    %2564 = vmatprep.subr.mxu0 0.0
    %2565 = vmatpush1.msra.mxu0 0.0
    %2566 = vmatprep.subr.mxu0 0.0
    %2567 = vmatpush1.msra.mxu0 0.0
    %2568 = vmatprep.subr.mxu0 0.0
    %2569 = vmatpush1.msra.mxu0 0.0
    %2570 = vmatprep.subr.mxu0 0.0
    %2571 = vmatpush1.msra.mxu0 %v2317
    %2572 = vmatprep.subr.mxu0 0.0
    %2573 = vmatpush1.msra.mxu0 %v2316
    %2574 = vmatprep.subr.mxu0 0.0
    %2575 = vmatpush1.msra.mxu0 %v2315
    %2576 = vmatprep.subr.mxu0 0.0
    %2577 = vmatpush1.msra.mxu0 %v2314
    %2578 = vmatprep.subr.mxu0 0.0
    %2579 = vmatpush2.msra.mxu0 0.0
    %2580 = vmatprep.subr.mxu0 0.0
    %2581 = vmatpush2.msra.mxu0 0.0
    %2582 = vmatprep.subr.mxu0 0.0
    %2583 = vmatpush2.msra.mxu0 0.0
    %2584 = vmatprep.subr.mxu0 0.0
    %2585 = vmatpush2.msra.mxu0 0.0
    %2586 = vmatprep.subr.mxu0 0.0
    %2587 = vmatpush2.msra.mxu0 0.0
    %2588 = vmatprep.subr.mxu0 0.0
    %2589 = vmatpush2.msra.mxu0 0.0
    %2590 = vmatprep.subr.mxu0 0.0
    %2591 = vmatpush2.msra.mxu0 0.0
    %2592 = vmatprep.subr.mxu0 0.0
    %2593 = vmatpush2.msra.mxu0 0.0
    %2594 = vmatprep.subr.mxu0 0.0
    %2595 = vmatpush2.msra.mxu0 0.0
    %2596 = vmatprep.subr.mxu0 0.0
    %2597 = vmatpush2.msra.mxu0 0.0
    %2598 = vmatprep.subr.mxu0 0.0
    %2599 = vmatpush2.msra.mxu0 0.0
    %2600 = vmatprep.subr.mxu0 0.0
    %2601 = vmatpush2.msra.mxu0 0.0
    %2602 = vmatprep.subr.mxu0 0.0
    %2603 = vmatpush2.msra.mxu0 0.0
    %2604 = vmatprep.subr.mxu0 0.0
    %2605 = vmatpush2.msra.mxu0 0.0
    %2606 = vmatprep.subr.mxu0 0.0
    %2607 = vmatpush2.msra.mxu0 0.0
    %2608 = vmatprep.subr.mxu0 0.0
    %2609 = vmatpush2.msra.mxu0 0.0
    %2610 = vmatprep.mubr.f32.mxu0 0.0
    %2611 = vmatmul.mubr.f32.gmra.mxu0 %v2544
    %v2612 = vpop.f32.mrf.mxu0
    %v2613 = vadd.f32 0.0, %v2612
    %v2614 = vpop.f32.mrf.mxu0
    %2615 = vdwg.mxu0
    %v2616 = vadd.f32 %v2312, %v2613
    %v2617 = vtanh.pop %v2616
    %v2618 = vld [vmem:[#allocation9] sm:$0xff]
    %v2619 = vld [vmem:[#allocation9 + $0x8] sm:$0xff]
    %v2620 = vld [vmem:[#allocation9 + $0x10] sm:$0xff]
    %v2621 = vld [vmem:[#allocation9 + $0x18] sm:$0xff]
    %v2622 = vld [vmem:[%s9] sm:$0x1]
    %v2624 = vlaneseq
    %v2625 = vshrl.u32 %v2624, 7
    %v2626 = vsub.s32 0, %v2625
    %v2627 = vrot.slane %v2622, %v2626
    %v2630 = vsel %vm442, %v2617, 0
    %2632 = vmatprep.subr.mxu0 0.0
    %2633 = vmatpush1.msra.mxu0 0.0
    %2634 = vmatprep.subr.mxu0 0.0
    %2635 = vmatpush1.msra.mxu0 0.0
    %2636 = vmatprep.subr.mxu0 0.0
    %2637 = vmatpush1.msra.mxu0 0.0
    %2638 = vmatprep.subr.mxu0 0.0
    %2639 = vmatpush1.msra.mxu0 0.0
    %2640 = vmatprep.subr.mxu0 0.0
    %2641 = vmatpush1.msra.mxu0 0.0
    %2642 = vmatprep.subr.mxu0 0.0
    %2643 = vmatpush1.msra.mxu0 0.0
    %2644 = vmatprep.subr.mxu0 0.0
    %2645 = vmatpush1.msra.mxu0 0.0
    %2646 = vmatprep.subr.mxu0 0.0
    %2647 = vmatpush1.msra.mxu0 0.0
    %2648 = vmatprep.subr.mxu0 0.0
    %2649 = vmatpush1.msra.mxu0 0.0
    %2650 = vmatprep.subr.mxu0 0.0
    %2651 = vmatpush1.msra.mxu0 0.0
    %2652 = vmatprep.subr.mxu0 0.0
    %2653 = vmatpush1.msra.mxu0 0.0
    %2654 = vmatprep.subr.mxu0 0.0
    %2655 = vmatpush1.msra.mxu0 0.0
    %2656 = vmatprep.subr.mxu0 0.0
    %2657 = vmatpush1.msra.mxu0 %v2621
    %2658 = vmatprep.subr.mxu0 0.0
    %2659 = vmatpush1.msra.mxu0 %v2620
    %2660 = vmatprep.subr.mxu0 0.0
    %2661 = vmatpush1.msra.mxu0 %v2619
    %2662 = vmatprep.subr.mxu0 0.0
    %2663 = vmatpush1.msra.mxu0 %v2618
    %2664 = vmatprep.subr.mxu0 0.0
    %2665 = vmatpush2.msra.mxu0 0.0
    %2666 = vmatprep.subr.mxu0 0.0
    %2667 = vmatpush2.msra.mxu0 0.0
    %2668 = vmatprep.subr.mxu0 0.0
    %2669 = vmatpush2.msra.mxu0 0.0
    %2670 = vmatprep.subr.mxu0 0.0
    %2671 = vmatpush2.msra.mxu0 0.0
    %2672 = vmatprep.subr.mxu0 0.0
    %2673 = vmatpush2.msra.mxu0 0.0
    %2674 = vmatprep.subr.mxu0 0.0
    %2675 = vmatpush2.msra.mxu0 0.0
    %2676 = vmatprep.subr.mxu0 0.0
    %2677 = vmatpush2.msra.mxu0 0.0
    %2678 = vmatprep.subr.mxu0 0.0
    %2679 = vmatpush2.msra.mxu0 0.0
    %2680 = vmatprep.subr.mxu0 0.0
    %2681 = vmatpush2.msra.mxu0 0.0
    %2682 = vmatprep.subr.mxu0 0.0
    %2683 = vmatpush2.msra.mxu0 0.0
    %2684 = vmatprep.subr.mxu0 0.0
    %2685 = vmatpush2.msra.mxu0 0.0
    %2686 = vmatprep.subr.mxu0 0.0
    %2687 = vmatpush2.msra.mxu0 0.0
    %2688 = vmatprep.subr.mxu0 0.0
    %2689 = vmatpush2.msra.mxu0 0.0
    %2690 = vmatprep.subr.mxu0 0.0
    %2691 = vmatpush2.msra.mxu0 0.0
    %2692 = vmatprep.subr.mxu0 0.0
    %2693 = vmatpush2.msra.mxu0 0.0
    %2694 = vmatprep.subr.mxu0 0.0
    %2695 = vmatpush2.msra.mxu0 0.0
    %2696 = vmatprep.mubr.f32.mxu0 0.0
    %2697 = vmatmul.mubr.f32.gmra.mxu0 %v2630
    %v2698 = vpop.f32.mrf.mxu0
    %v2699 = vadd.f32 %v2627, %v2698
    %v2700 = vpop.f32.mrf.mxu0
    %2701 = vdwg.mxu0
    %2702 = vst [vmem:[%s10] sm:$0xff] %v2699
    // Predicated region
    $region62: #{crnn_forward.1} parent=1 // pred_check
      _
    $region63: #{crnn_forward.1} parent=1 // pred_check_branch
      %2704 = sbr.rel (0) target = $region65
    $region64: #{crnn_forward.1} parent=1 // pred_region
      _
    $region65: #{crnn_forward.1} parent=1 // pred_fallthru
      _
    // Predicated region
    $region66: #{crnn_forward.1} parent=1 // pred_check
      _
    $region67: #{crnn_forward.1} parent=1 // pred_check_branch
      %2706 = sbr.rel (0) target = $region69
    $region68: #{crnn_forward.1} parent=1 // pred_region
      _
    $region69: #{crnn_forward.1} parent=1 // pred_fallthru
      _
    %2707 = vsyncpa [#allocation3], 1
    %2708 = vsyncpa [#allocation5], 1
    %2709 = vsyncpa [#allocation8], 1

</llo_original>
